<compile_context>
chip_gen: v7x
topology: tpu7x:2x2x1
jax: 0.10.0
libtpu: 0.0.40
codegen_flags: <defaults>
</compile_context>

<pallas_src>
import math
from functools import partial

import jax
import jax.numpy as jnp
from jax import lax
from jax.experimental import pallas as pl
from jax.experimental.pallas import tpu as pltpu


def _pick_time_chunk(seq_sz, bs_blk, input_sz, HS, mm_isz,
                     target=64, vmem_budget=24 << 20):
    """Largest multiple-of-8 time chunk whose per-chunk buffers fit the budget,
    minimizing padded timesteps (seq is padded to a multiple of the chunk)."""
    per_t = bs_blk * (2 * input_sz * mm_isz   # x block (double buffered)
                      + 2 * HS * 4            # hidden_seq block (double buffered)
                      + 4 * HS * 4)           # gates scratch (f32)
    t_cap = max(8, min(target, (vmem_budget // max(per_t, 1)) // 8 * 8))
    seq8 = ((seq_sz + 7) // 8) * 8
    t_cap = min(t_cap, seq8)
    best_key, best_t = None, 8
    for cand in range(8, t_cap + 1, 8):
        pad = (-seq_sz) % cand
        key = (pad, -cand)                    # least padding, then largest chunk
        if best_key is None or key < best_key:
            best_key, best_t = key, cand
    seq_pad = seq_sz + ((-seq_sz) % best_t)
    return best_t, seq_pad


def _vmem_limit_bytes(bs_blk, t_chunk, input_sz, HS, four_hs, mm_isz):
    x_blk = t_chunk * bs_blk * input_sz * mm_isz
    hs_blk = bs_blk * t_chunk * HS * 4
    w_b = input_sz * four_hs * mm_isz
    u_b = HS * four_hs * mm_isz
    b_b = four_hs * 4
    hc_out = 2 * bs_blk * HS * 4
    gx_scr = t_chunk * bs_blk * four_hs * 4
    hc_scr = 2 * bs_blk * HS * 4
    need = 2 * (x_blk + hs_blk + w_b + u_b + b_b + hc_out) + gx_scr + hc_scr
    return int(min(max(need * 5 // 4 + (2 << 20), 16 << 20), 64 << 20))


def _lstm_fused_kernel(x_ref, w_ref, b_ref, u_ref,
                       hseq_ref, h_out_ref, c_out_ref,
                       gx_sc, h_sc, c_sc,
                       *, HS, bs_blk, t_chunk, seq_true, seq_pad, unroll):
    four_hs = 4 * HS
    t_idx = pl.program_id(1)                  # time-chunk axis (sequential)

    # Zero-init the carried state at the first time chunk of each batch block.
    @pl.when(t_idx == 0)
    def _():
        h_sc[...] = jnp.zeros_like(h_sc)
        c_sc[...] = jnp.zeros_like(c_sc)

    # ---- Fused input projection: one MXU GEMM per chunk over time-major rows.
    # gates_x lives only in VMEM scratch -> no HBM round trip.
    gx_sc[...] = (
        jnp.dot(x_ref[...], w_ref[...], preferred_element_type=jnp.float32)
        + b_ref[...]
    )

    # Hoisted gate-scale row for the fused wide tanh:
    #   sigmoid(z) = 0.5*tanh(0.5*z) + 0.5, tanh(z) = tanh(z)
    # -> scale i/f/o lanes by 0.5, g lanes by 1.0, single EUP push per step.
    lane = lax.broadcasted_iota(jnp.int32, (1, four_hs), 1)
    gate_scale = jnp.where((lane >= 2 * HS) & (lane < 3 * HS),
                           jnp.float32(1.0), jnp.float32(0.5))

    def step(t, carry):
        h, c = carry                                        # f32 (bs_blk, HS)
        row0 = t * bs_blk
        if bs_blk % 8 == 0:
            row0 = pl.multiple_of(row0, 8)
        gx_t = gx_sc[pl.ds(row0, bs_blk), :]                # (bs_blk, 4HS) f32
        # U stays VMEM-resident; feed the ref directly (no vreg-pinning hoist).
        gates = gx_t + jnp.dot(h.astype(u_ref.dtype), u_ref[...],
                               preferred_element_type=jnp.float32)
        z = jnp.tanh(gates * gate_scale)                    # one wide EUP op
        i_t = 0.5 * z[:, :HS] + 0.5
        f_t = 0.5 * z[:, HS:2 * HS] + 0.5
        g_t = z[:, 2 * HS:3 * HS]
        o_t = 0.5 * z[:, 3 * HS:] + 0.5
        c_new = f_t * c + i_t * g_t
        h_new = o_t * jnp.tanh(c_new)
        if seq_pad != seq_true:
            # Padded tail timesteps must not advance the recurrent state.
            valid = (t_idx * t_chunk + t) < seq_true
            h_new = jnp.where(valid, h_new, h)
            c_new = jnp.where(valid, c_new, c)
        hseq_ref[:, pl.ds(t, 1), :] = h_new[:, None, :].astype(hseq_ref.dtype)
        return h_new, c_new

    h_fin, c_fin = lax.fori_loop(0, t_chunk, step, (h_sc[...], c_sc[...]),
                                 unroll=unroll)

    h_sc[...] = h_fin
    c_sc[...] = c_fin
    # Constant-index output blocks: cheap VMEM store every chunk, HBM writeback
    # once per batch block when its time loop finishes.
    h_out_ref[...] = h_fin.astype(h_out_ref.dtype)
    c_out_ref[...] = c_fin.astype(c_out_ref.dtype)


def custom_lstm_forward(x, W, U, bias, matmul_dtype=jnp.bfloat16):
    """x: (batch, seq, input_sz) -> (hidden_seq, (h_t, c_t)), matching the
    PyTorch CustomLSTM forward (init_states=None path).  matmul_dtype casts
    only the MXU operands (x, W, U, h); gates / cell state stay float32."""
    bs, seq_sz, input_sz = x.shape
    four_hs = W.shape[1]
    HS = four_hs // 4
    mm_dtype = jnp.dtype(matmul_dtype)
    mm_isz = mm_dtype.itemsize

    # Batch is the only parallel axis of the recurrence: shard it across the
    # two v7x TensorCores when it splits into >=8-row blocks (no-op otherwise).
    n_bblk = 2 if (bs % 16 == 0 and bs >= 16) else 1
    bs_blk = bs // n_bblk

    t_chunk, seq_pad = _pick_time_chunk(seq_sz, bs_blk, input_sz, HS, mm_isz)
    n_chunks = seq_pad // t_chunk
    unroll = int(min(t_chunk, 8))

    Wm = W.astype(mm_dtype)
    Um = U.astype(mm_dtype)
    b2d = bias.astype(jnp.float32).reshape(1, four_hs)

    xm = x.astype(mm_dtype)
    if seq_pad != seq_sz:
        xm = jnp.pad(xm, ((0, 0), (0, seq_pad - seq_sz), (0, 0)))
    # Time-major row layout per batch block: row (t, j) = t*bs_blk + j, so each
    # timestep's gate slab is a contiguous lane-dense (bs_blk, 4HS) tile.
    x3d = xm.reshape(n_bblk, bs_blk, seq_pad, input_sz)
    x3d = jnp.transpose(x3d, (0, 2, 1, 3)).reshape(
        n_bblk, seq_pad * bs_blk, input_sz)

    vmem_limit = _vmem_limit_bytes(bs_blk, t_chunk, input_sz, HS, four_hs, mm_isz)

    kernel = partial(_lstm_fused_kernel, HS=HS, bs_blk=bs_blk, t_chunk=t_chunk,
                     seq_true=seq_sz, seq_pad=seq_pad, unroll=unroll)

    hidden_seq, h_t, c_t = pl.pallas_call(
        kernel,
        out_shape=(
            jax.ShapeDtypeStruct((bs, seq_pad, HS), jnp.float32),  # hidden_seq
            jax.ShapeDtypeStruct((bs, HS), jnp.float32),           # h_t
            jax.ShapeDtypeStruct((bs, HS), jnp.float32),           # c_t
        ),
        grid=(n_bblk, n_chunks),
        in_specs=[
            # x chunk, time-major rows; leading batch-block axis squeezed out.
            pl.BlockSpec((None, t_chunk * bs_blk, input_sz),
                         lambda b, c: (b, c, 0)),
            pl.BlockSpec((input_sz, four_hs), lambda b, c: (0, 0)),  # W resident
            pl.BlockSpec((1, four_hs), lambda b, c: (0, 0)),         # bias resident
            pl.BlockSpec((HS, four_hs), lambda b, c: (0, 0)),        # U resident
        ],
        out_specs=(
            pl.BlockSpec((bs_blk, t_chunk, HS), lambda b, c: (b, c, 0)),
            pl.BlockSpec((bs_blk, HS), lambda b, c: (b, 0)),
            pl.BlockSpec((bs_blk, HS), lambda b, c: (b, 0)),
        ),
        scratch_shapes=[
            pltpu.VMEM((t_chunk * bs_blk, four_hs), jnp.float32),  # gates chunk
            pltpu.VMEM((bs_blk, HS), jnp.float32),                 # h carry
            pltpu.VMEM((bs_blk, HS), jnp.float32),                 # c carry
        ],
        compiler_params=pltpu.CompilerParams(
            dimension_semantics=("parallel", "arbitrary"),
            vmem_limit_bytes=vmem_limit,
        ),
    )(x3d, Wm, b2d, Um)

    if seq_pad != seq_sz:
        hidden_seq = hidden_seq[:, :seq_sz, :]
    return hidden_seq, (h_t, c_t)


def _lstm_reference(x, W, U, bias):
    """Pure-JAX reference mirroring the PyTorch forward, for validation."""
    bs, seq_sz, _ = x.shape
    HS = W.shape[1] // 4
    h = jnp.zeros((bs, HS), jnp.float32)
    c = jnp.zeros((bs, HS), jnp.float32)
    outs = []
    for t in range(seq_sz):
        gates = x[:, t, :] @ W + h @ U + bias
        i_t = jax.nn.sigmoid(gates[:, :HS])
        f_t = jax.nn.sigmoid(gates[:, HS:2 * HS])
        g_t = jnp.tanh(gates[:, 2 * HS:3 * HS])
        o_t = jax.nn.sigmoid(gates[:, 3 * HS:])
        c = f_t * c + i_t * g_t
        h = o_t * jnp.tanh(c)
        outs.append(h)
    return jnp.stack(outs, axis=1), (h, c)


if __name__ == "__main__":
    batch, seq, input_sz, hidden_sz = 2, 8, 16, 32

    key = jax.random.PRNGKey(0)
    kx, kw, ku, kb = jax.random.split(key, 4)

    stdv = 1.0 / math.sqrt(hidden_sz)
    W = jax.random.uniform(kw, (input_sz, hidden_sz * 4), jnp.float32, -stdv, stdv)
    U = jax.random.uniform(ku, (hidden_sz, hidden_sz * 4), jnp.float32, -stdv, stdv)
    bias = jax.random.uniform(kb, (hidden_sz * 4,), jnp.float32, -stdv, stdv)
    x = jax.random.normal(kx, (batch, seq, input_sz), jnp.float32)

    ref_seq, (ref_h, ref_c) = _lstm_reference(x, W, U, bias)

    # f32-MXU path: tight check against the pure-JAX reference.
    hs_f32, (h_f32, c_f32) = custom_lstm_forward(x, W, U, bias,
                                                 matmul_dtype=jnp.float32)
    jax.block_until_ready((hs_f32, h_f32, c_f32))
    assert hs_f32.shape == (batch, seq, hidden_sz)
    assert h_f32.shape == (batch, hidden_sz) and c_f32.shape == (batch, hidden_sz)
    assert jnp.allclose(hs_f32, ref_seq, atol=1e-5, rtol=1e-5)
    assert jnp.allclose(h_f32, ref_h, atol=1e-5, rtol=1e-5)
    assert jnp.allclose(c_f32, ref_c, atol=1e-5, rtol=1e-5)

    # Default perf config: bf16 MXU operands, f32 gates/state.
    hs_bf, (h_bf, c_bf) = custom_lstm_forward(x, W, U, bias)
    jax.block_until_ready((hs_bf, h_bf, c_bf))
    assert jnp.allclose(hs_bf, ref_seq, atol=5e-2, rtol=5e-2)
    assert jnp.allclose(h_bf, ref_h, atol=5e-2, rtol=5e-2)
    assert jnp.allclose(c_bf, ref_c, atol=5e-2, rtol=5e-2)

    print("KERNEL_OK")
</pallas_src>

<mosaic_0001>
module attributes {stable_mosaic.version = 11 : i64} {
  func.func @_lstm_fused_kernel(%arg0: i32, %arg1: i32, %arg2: memref<1x16x16xf32, #tpu.memory_space<vmem>>, %arg3: memref<16x128xf32, #tpu.memory_space<vmem>>, %arg4: memref<1x128xf32, #tpu.memory_space<vmem>>, %arg5: memref<32x128xf32, #tpu.memory_space<vmem>>, %arg6: memref<2x8x32xf32, #tpu.memory_space<vmem>>, %arg7: memref<2x32xf32, #tpu.memory_space<vmem>>, %arg8: memref<2x32xf32, #tpu.memory_space<vmem>>, %arg9: memref<16x128xf32, #tpu.memory_space<vmem>>, %arg10: memref<2x32xf32, #tpu.memory_space<vmem>>, %arg11: memref<2x32xf32, #tpu.memory_space<vmem>>) attributes {dimension_semantics = [#tpu.dimension_semantics<parallel>, #tpu.dimension_semantics<arbitrary>], iteration_bounds = array<i64: 1, 1>, scalar_prefetch = 0 : i64, scratch_operands = 3 : i64, tpu.core_type = #tpu.core_type<tc>, window_params = [{transform_indices = @transform_0, window_bounds = array<i64: 1, 16, 16>}, {pipeline_mode = #tpu.pipeline_mode<synchronous>, transform_indices = @transform_1, window_bounds = array<i64: 16, 128>}, {pipeline_mode = #tpu.pipeline_mode<synchronous>, transform_indices = @transform_2, window_bounds = array<i64: 1, 128>}, {pipeline_mode = #tpu.pipeline_mode<synchronous>, transform_indices = @transform_3, window_bounds = array<i64: 32, 128>}, {transform_indices = @transform_4, window_bounds = array<i64: 2, 8, 32>}, {transform_indices = @transform_5, window_bounds = array<i64: 2, 32>}, {transform_indices = @transform_6, window_bounds = array<i64: 2, 32>}]} {
    %c0_i32 = arith.constant 0 : i32
    %0 = arith.cmpi eq, %arg1, %c0_i32 : i32
    %1 = arith.extui %0 : i1 to i32
    %c0_i32_0 = arith.constant 0 : i32
    %2 = arith.cmpi ne, %1, %c0_i32_0 : i32
    scf.if %2 {
      %cst_128 = arith.constant 0.000000e+00 : f32
      %290 = vector.broadcast %cst_128 : f32 to vector<2x32xf32>
      %c0_129 = arith.constant 0 : index
      %c0_130 = arith.constant 0 : index
      %291 = vector.load %arg10[%c0_129, %c0_130] : memref<2x32xf32, #tpu.memory_space<vmem>>, vector<2x32xf32>
      tpu.vector_store %arg10[%c0_129, %c0_130], %290 {strides = array<i32>} : memref<2x32xf32, #tpu.memory_space<vmem>>, vector<2x32xf32>,
      %cst_131 = arith.constant 0.000000e+00 : f32
      %292 = vector.broadcast %cst_131 : f32 to vector<2x32xf32>
      %c0_132 = arith.constant 0 : index
      %c0_133 = arith.constant 0 : index
      %293 = vector.load %arg11[%c0_132, %c0_133] : memref<2x32xf32, #tpu.memory_space<vmem>>, vector<2x32xf32>
      tpu.vector_store %arg11[%c0_132, %c0_133], %292 {strides = array<i32>} : memref<2x32xf32, #tpu.memory_space<vmem>>, vector<2x32xf32>,
    } else {
    }
    %c0 = arith.constant 0 : index
    %c0_1 = arith.constant 0 : index
    %c0_2 = arith.constant 0 : index
    %3 = vector.load %arg2[%c0, %c0_1, %c0_2] : memref<1x16x16xf32, #tpu.memory_space<vmem>>, vector<1x16x16xf32>
    %4 = vector.shape_cast %3 : vector<1x16x16xf32> to vector<16x16xf32>
    %c0_3 = arith.constant 0 : index
    %c0_4 = arith.constant 0 : index
    %5 = vector.load %arg3[%c0_3, %c0_4] : memref<16x128xf32, #tpu.memory_space<vmem>>, vector<16x128xf32>
    %cst = arith.constant dense<0.000000e+00> : vector<16x128xf32>
    %6 = tpu.matmul %4, %5, %cst {dimension_numbers = #tpu.dot_dimension_numbers<[1], [0], [0], [1], [0, 0, 1, 1], [], []>} : vector<16x16xf32>, vector<16x128xf32>, vector<16x128xf32> -> vector<16x128xf32>
    %c0_5 = arith.constant 0 : index
    %c0_6 = arith.constant 0 : index
    %7 = vector.load %arg4[%c0_5, %c0_6] : memref<1x128xf32, #tpu.memory_space<vmem>>, vector<1x128xf32>
    %8 = vector.broadcast %7 : vector<1x128xf32> to vector<16x128xf32>
    %9 = arith.addf %6, %8 : vector<16x128xf32>
    %c0_7 = arith.constant 0 : index
    %c0_8 = arith.constant 0 : index
    %10 = vector.load %arg9[%c0_7, %c0_8] : memref<16x128xf32, #tpu.memory_space<vmem>>, vector<16x128xf32>
    tpu.vector_store %arg9[%c0_7, %c0_8], %9 {strides = array<i32>} : memref<16x128xf32, #tpu.memory_space<vmem>>, vector<16x128xf32>,
    %11 = tpu.iota {dimensions = array<i32: 1>} : vector<1x128xi32>
    %c64_i32 = arith.constant 64 : i32
    %12 = vector.broadcast %c64_i32 : i32 to vector<1x128xi32>
    %13 = arith.cmpi sge, %11, %12 : vector<1x128xi32>
    %c96_i32 = arith.constant 96 : i32
    %14 = vector.broadcast %c96_i32 : i32 to vector<1x128xi32>
    %15 = arith.cmpi slt, %11, %14 : vector<1x128xi32>
    %16 = arith.andi %13, %15 : vector<1x128xi1>
    %cst_9 = arith.constant 1.000000e+00 : f32
    %cst_10 = arith.constant 5.000000e-01 : f32
    %17 = vector.broadcast %cst_9 : f32 to vector<1x128xf32>
    %18 = vector.broadcast %cst_10 : f32 to vector<1x128xf32>
    %19 = arith.select %16, %17, %18 : vector<1x128xi1>, vector<1x128xf32>
    %c0_11 = arith.constant 0 : index
    %c0_12 = arith.constant 0 : index
    %20 = vector.load %arg10[%c0_11, %c0_12] : memref<2x32xf32, #tpu.memory_space<vmem>>, vector<2x32xf32>
    %c0_13 = arith.constant 0 : index
    %c0_14 = arith.constant 0 : index
    %21 = vector.load %arg11[%c0_13, %c0_14] : memref<2x32xf32, #tpu.memory_space<vmem>>, vector<2x32xf32>
    %c0_i32_15 = arith.constant 0 : i32
    %c2_i32 = arith.constant 2 : i32
    %22 = arith.muli %c0_i32_15, %c2_i32 : i32
    %23 = arith.index_cast %22 : i32 to index
    %c0_16 = arith.constant 0 : index
    %24 = vector.load %arg9[%23, %c0_16] : memref<16x128xf32, #tpu.memory_space<vmem>>, vector<2x128xf32>
    %c0_17 = arith.constant 0 : index
    %c0_18 = arith.constant 0 : index
    %25 = vector.load %arg5[%c0_17, %c0_18] : memref<32x128xf32, #tpu.memory_space<vmem>>, vector<32x128xf32>
    %cst_19 = arith.constant dense<0.000000e+00> : vector<2x128xf32>
    %26 = tpu.matmul %20, %25, %cst_19 {dimension_numbers = #tpu.dot_dimension_numbers<[1], [0], [0], [1], [0, 0, 1, 1], [], []>} : vector<2x32xf32>, vector<32x128xf32>, vector<2x128xf32> -> vector<2x128xf32>
    %27 = arith.addf %24, %26 : vector<2x128xf32>
    %28 = vector.broadcast %19 : vector<1x128xf32> to vector<2x128xf32>
    %29 = arith.mulf %27, %28 : vector<2x128xf32>
    %30 = math.tanh %29 : vector<2x128xf32>
    %31 = vector.extract_strided_slice %30 {offsets = [0, 0], sizes = [2, 32], strides = [1, 1]} : vector<2x128xf32> to vector<2x32xf32>
    %cst_20 = arith.constant 5.000000e-01 : f32
    %32 = vector.broadcast %cst_20 : f32 to vector<2x32xf32>
    %33 = arith.mulf %32, %31 : vector<2x32xf32>
    %cst_21 = arith.constant 5.000000e-01 : f32
    %34 = vector.broadcast %cst_21 : f32 to vector<2x32xf32>
    %35 = arith.addf %33, %34 : vector<2x32xf32>
    %36 = vector.extract_strided_slice %30 {offsets = [0, 32], sizes = [2, 32], strides = [1, 1]} : vector<2x128xf32> to vector<2x32xf32>
    %cst_22 = arith.constant 5.000000e-01 : f32
    %37 = vector.broadcast %cst_22 : f32 to vector<2x32xf32>
    %38 = arith.mulf %37, %36 : vector<2x32xf32>
    %cst_23 = arith.constant 5.000000e-01 : f32
    %39 = vector.broadcast %cst_23 : f32 to vector<2x32xf32>
    %40 = arith.addf %38, %39 : vector<2x32xf32>
    %41 = vector.extract_strided_slice %30 {offsets = [0, 64], sizes = [2, 32], strides = [1, 1]} : vector<2x128xf32> to vector<2x32xf32>
    %42 = vector.extract_strided_slice %30 {offsets = [0, 96], sizes = [2, 32], strides = [1, 1]} : vector<2x128xf32> to vector<2x32xf32>
    %cst_24 = arith.constant 5.000000e-01 : f32
    %43 = vector.broadcast %cst_24 : f32 to vector<2x32xf32>
    %44 = arith.mulf %43, %42 : vector<2x32xf32>
    %cst_25 = arith.constant 5.000000e-01 : f32
    %45 = vector.broadcast %cst_25 : f32 to vector<2x32xf32>
    %46 = arith.addf %44, %45 : vector<2x32xf32>
    %47 = arith.mulf %40, %21 : vector<2x32xf32>
    %48 = arith.mulf %35, %41 : vector<2x32xf32>
    %49 = arith.addf %47, %48 : vector<2x32xf32>
    %50 = math.tanh %49 : vector<2x32xf32>
    %51 = arith.mulf %46, %50 : vector<2x32xf32>
    %52 = vector.shape_cast %51 : vector<2x32xf32> to vector<2x1x32xf32>
    %c0_26 = arith.constant 0 : index
    %53 = arith.index_cast %c0_i32_15 : i32 to index
    %c0_27 = arith.constant 0 : index
    %54 = vector.load %arg6[%c0_26, %53, %c0_27] : memref<2x8x32xf32, #tpu.memory_space<vmem>>, vector<2x1x32xf32>
    tpu.vector_store %arg6[%c0_26, %53, %c0_27], %52 {strides = array<i32>} : memref<2x8x32xf32, #tpu.memory_space<vmem>>, vector<2x1x32xf32>,
    %c1_i32 = arith.constant 1 : i32
    %c2_i32_28 = arith.constant 2 : i32
    %55 = arith.muli %c1_i32, %c2_i32_28 : i32
    %56 = arith.index_cast %55 : i32 to index
    %c0_29 = arith.constant 0 : index
    %57 = vector.load %arg9[%56, %c0_29] : memref<16x128xf32, #tpu.memory_space<vmem>>, vector<2x128xf32>
    %c0_30 = arith.constant 0 : index
    %c0_31 = arith.constant 0 : index
    %58 = vector.load %arg5[%c0_30, %c0_31] : memref<32x128xf32, #tpu.memory_space<vmem>>, vector<32x128xf32>
    %cst_32 = arith.constant dense<0.000000e+00> : vector<2x128xf32>
    %59 = tpu.matmul %51, %58, %cst_32 {dimension_numbers = #tpu.dot_dimension_numbers<[1], [0], [0], [1], [0, 0, 1, 1], [], []>} : vector<2x32xf32>, vector<32x128xf32>, vector<2x128xf32> -> vector<2x128xf32>
    %60 = arith.addf %57, %59 : vector<2x128xf32>
    %61 = vector.broadcast %19 : vector<1x128xf32> to vector<2x128xf32>
    %62 = arith.mulf %60, %61 : vector<2x128xf32>
    %63 = math.tanh %62 : vector<2x128xf32>
    %64 = vector.extract_strided_slice %63 {offsets = [0, 0], sizes = [2, 32], strides = [1, 1]} : vector<2x128xf32> to vector<2x32xf32>
    %cst_33 = arith.constant 5.000000e-01 : f32
    %65 = vector.broadcast %cst_33 : f32 to vector<2x32xf32>
    %66 = arith.mulf %65, %64 : vector<2x32xf32>
    %cst_34 = arith.constant 5.000000e-01 : f32
    %67 = vector.broadcast %cst_34 : f32 to vector<2x32xf32>
    %68 = arith.addf %66, %67 : vector<2x32xf32>
    %69 = vector.extract_strided_slice %63 {offsets = [0, 32], sizes = [2, 32], strides = [1, 1]} : vector<2x128xf32> to vector<2x32xf32>
    %cst_35 = arith.constant 5.000000e-01 : f32
    %70 = vector.broadcast %cst_35 : f32 to vector<2x32xf32>
    %71 = arith.mulf %70, %69 : vector<2x32xf32>
    %cst_36 = arith.constant 5.000000e-01 : f32
    %72 = vector.broadcast %cst_36 : f32 to vector<2x32xf32>
    %73 = arith.addf %71, %72 : vector<2x32xf32>
    %74 = vector.extract_strided_slice %63 {offsets = [0, 64], sizes = [2, 32], strides = [1, 1]} : vector<2x128xf32> to vector<2x32xf32>
    %75 = vector.extract_strided_slice %63 {offsets = [0, 96], sizes = [2, 32], strides = [1, 1]} : vector<2x128xf32> to vector<2x32xf32>
    %cst_37 = arith.constant 5.000000e-01 : f32
    %76 = vector.broadcast %cst_37 : f32 to vector<2x32xf32>
    %77 = arith.mulf %76, %75 : vector<2x32xf32>
    %cst_38 = arith.constant 5.000000e-01 : f32
    %78 = vector.broadcast %cst_38 : f32 to vector<2x32xf32>
    %79 = arith.addf %77, %78 : vector<2x32xf32>
    %80 = arith.mulf %73, %49 : vector<2x32xf32>
    %81 = arith.mulf %68, %74 : vector<2x32xf32>
    %82 = arith.addf %80, %81 : vector<2x32xf32>
    %83 = math.tanh %82 : vector<2x32xf32>
    %84 = arith.mulf %79, %83 : vector<2x32xf32>
    %85 = vector.shape_cast %84 : vector<2x32xf32> to vector<2x1x32xf32>
    %c0_39 = arith.constant 0 : index
    %86 = arith.index_cast %c1_i32 : i32 to index
    %c0_40 = arith.constant 0 : index
    %87 = vector.load %arg6[%c0_39, %86, %c0_40] : memref<2x8x32xf32, #tpu.memory_space<vmem>>, vector<2x1x32xf32>
    tpu.vector_store %arg6[%c0_39, %86, %c0_40], %85 {strides = array<i32>} : memref<2x8x32xf32, #tpu.memory_space<vmem>>, vector<2x1x32xf32>,
    %c2_i32_41 = arith.constant 2 : i32
    %c2_i32_42 = arith.constant 2 : i32
    %88 = arith.muli %c2_i32_41, %c2_i32_42 : i32
    %89 = arith.index_cast %88 : i32 to index
    %c0_43 = arith.constant 0 : index
    %90 = vector.load %arg9[%89, %c0_43] : memref<16x128xf32, #tpu.memory_space<vmem>>, vector<2x128xf32>
    %c0_44 = arith.constant 0 : index
    %c0_45 = arith.constant 0 : index
    %91 = vector.load %arg5[%c0_44, %c0_45] : memref<32x128xf32, #tpu.memory_space<vmem>>, vector<32x128xf32>
    %cst_46 = arith.constant dense<0.000000e+00> : vector<2x128xf32>
    %92 = tpu.matmul %84, %91, %cst_46 {dimension_numbers = #tpu.dot_dimension_numbers<[1], [0], [0], [1], [0, 0, 1, 1], [], []>} : vector<2x32xf32>, vector<32x128xf32>, vector<2x128xf32> -> vector<2x128xf32>
    %93 = arith.addf %90, %92 : vector<2x128xf32>
    %94 = vector.broadcast %19 : vector<1x128xf32> to vector<2x128xf32>
    %95 = arith.mulf %93, %94 : vector<2x128xf32>
    %96 = math.tanh %95 : vector<2x128xf32>
    %97 = vector.extract_strided_slice %96 {offsets = [0, 0], sizes = [2, 32], strides = [1, 1]} : vector<2x128xf32> to vector<2x32xf32>
    %cst_47 = arith.constant 5.000000e-01 : f32
    %98 = vector.broadcast %cst_47 : f32 to vector<2x32xf32>
    %99 = arith.mulf %98, %97 : vector<2x32xf32>
    %cst_48 = arith.constant 5.000000e-01 : f32
    %100 = vector.broadcast %cst_48 : f32 to vector<2x32xf32>
    %101 = arith.addf %99, %100 : vector<2x32xf32>
    %102 = vector.extract_strided_slice %96 {offsets = [0, 32], sizes = [2, 32], strides = [1, 1]} : vector<2x128xf32> to vector<2x32xf32>
    %cst_49 = arith.constant 5.000000e-01 : f32
    %103 = vector.broadcast %cst_49 : f32 to vector<2x32xf32>
    %104 = arith.mulf %103, %102 : vector<2x32xf32>
    %cst_50 = arith.constant 5.000000e-01 : f32
    %105 = vector.broadcast %cst_50 : f32 to vector<2x32xf32>
    %106 = arith.addf %104, %105 : vector<2x32xf32>
    %107 = vector.extract_strided_slice %96 {offsets = [0, 64], sizes = [2, 32], strides = [1, 1]} : vector<2x128xf32> to vector<2x32xf32>
    %108 = vector.extract_strided_slice %96 {offsets = [0, 96], sizes = [2, 32], strides = [1, 1]} : vector<2x128xf32> to vector<2x32xf32>
    %cst_51 = arith.constant 5.000000e-01 : f32
    %109 = vector.broadcast %cst_51 : f32 to vector<2x32xf32>
    %110 = arith.mulf %109, %108 : vector<2x32xf32>
    %cst_52 = arith.constant 5.000000e-01 : f32
    %111 = vector.broadcast %cst_52 : f32 to vector<2x32xf32>
    %112 = arith.addf %110, %111 : vector<2x32xf32>
    %113 = arith.mulf %106, %82 : vector<2x32xf32>
    %114 = arith.mulf %101, %107 : vector<2x32xf32>
    %115 = arith.addf %113, %114 : vector<2x32xf32>
    %116 = math.tanh %115 : vector<2x32xf32>
    %117 = arith.mulf %112, %116 : vector<2x32xf32>
    %118 = vector.shape_cast %117 : vector<2x32xf32> to vector<2x1x32xf32>
    %c0_53 = arith.constant 0 : index
    %119 = arith.index_cast %c2_i32_41 : i32 to index
    %c0_54 = arith.constant 0 : index
    %120 = vector.load %arg6[%c0_53, %119, %c0_54] : memref<2x8x32xf32, #tpu.memory_space<vmem>>, vector<2x1x32xf32>
    tpu.vector_store %arg6[%c0_53, %119, %c0_54], %118 {strides = array<i32>} : memref<2x8x32xf32, #tpu.memory_space<vmem>>, vector<2x1x32xf32>,
    %c3_i32 = arith.constant 3 : i32
    %c2_i32_55 = arith.constant 2 : i32
    %121 = arith.muli %c3_i32, %c2_i32_55 : i32
    %122 = arith.index_cast %121 : i32 to index
    %c0_56 = arith.constant 0 : index
    %123 = vector.load %arg9[%122, %c0_56] : memref<16x128xf32, #tpu.memory_space<vmem>>, vector<2x128xf32>
    %c0_57 = arith.constant 0 : index
    %c0_58 = arith.constant 0 : index
    %124 = vector.load %arg5[%c0_57, %c0_58] : memref<32x128xf32, #tpu.memory_space<vmem>>, vector<32x128xf32>
    %cst_59 = arith.constant dense<0.000000e+00> : vector<2x128xf32>
    %125 = tpu.matmul %117, %124, %cst_59 {dimension_numbers = #tpu.dot_dimension_numbers<[1], [0], [0], [1], [0, 0, 1, 1], [], []>} : vector<2x32xf32>, vector<32x128xf32>, vector<2x128xf32> -> vector<2x128xf32>
    %126 = arith.addf %123, %125 : vector<2x128xf32>
    %127 = vector.broadcast %19 : vector<1x128xf32> to vector<2x128xf32>
    %128 = arith.mulf %126, %127 : vector<2x128xf32>
    %129 = math.tanh %128 : vector<2x128xf32>
    %130 = vector.extract_strided_slice %129 {offsets = [0, 0], sizes = [2, 32], strides = [1, 1]} : vector<2x128xf32> to vector<2x32xf32>
    %cst_60 = arith.constant 5.000000e-01 : f32
    %131 = vector.broadcast %cst_60 : f32 to vector<2x32xf32>
    %132 = arith.mulf %131, %130 : vector<2x32xf32>
    %cst_61 = arith.constant 5.000000e-01 : f32
    %133 = vector.broadcast %cst_61 : f32 to vector<2x32xf32>
    %134 = arith.addf %132, %133 : vector<2x32xf32>
    %135 = vector.extract_strided_slice %129 {offsets = [0, 32], sizes = [2, 32], strides = [1, 1]} : vector<2x128xf32> to vector<2x32xf32>
    %cst_62 = arith.constant 5.000000e-01 : f32
    %136 = vector.broadcast %cst_62 : f32 to vector<2x32xf32>
    %137 = arith.mulf %136, %135 : vector<2x32xf32>
    %cst_63 = arith.constant 5.000000e-01 : f32
    %138 = vector.broadcast %cst_63 : f32 to vector<2x32xf32>
    %139 = arith.addf %137, %138 : vector<2x32xf32>
    %140 = vector.extract_strided_slice %129 {offsets = [0, 64], sizes = [2, 32], strides = [1, 1]} : vector<2x128xf32> to vector<2x32xf32>
    %141 = vector.extract_strided_slice %129 {offsets = [0, 96], sizes = [2, 32], strides = [1, 1]} : vector<2x128xf32> to vector<2x32xf32>
    %cst_64 = arith.constant 5.000000e-01 : f32
    %142 = vector.broadcast %cst_64 : f32 to vector<2x32xf32>
    %143 = arith.mulf %142, %141 : vector<2x32xf32>
    %cst_65 = arith.constant 5.000000e-01 : f32
    %144 = vector.broadcast %cst_65 : f32 to vector<2x32xf32>
    %145 = arith.addf %143, %144 : vector<2x32xf32>
    %146 = arith.mulf %139, %115 : vector<2x32xf32>
    %147 = arith.mulf %134, %140 : vector<2x32xf32>
    %148 = arith.addf %146, %147 : vector<2x32xf32>
    %149 = math.tanh %148 : vector<2x32xf32>
    %150 = arith.mulf %145, %149 : vector<2x32xf32>
    %151 = vector.shape_cast %150 : vector<2x32xf32> to vector<2x1x32xf32>
    %c0_66 = arith.constant 0 : index
    %152 = arith.index_cast %c3_i32 : i32 to index
    %c0_67 = arith.constant 0 : index
    %153 = vector.load %arg6[%c0_66, %152, %c0_67] : memref<2x8x32xf32, #tpu.memory_space<vmem>>, vector<2x1x32xf32>
    tpu.vector_store %arg6[%c0_66, %152, %c0_67], %151 {strides = array<i32>} : memref<2x8x32xf32, #tpu.memory_space<vmem>>, vector<2x1x32xf32>,
    %c4_i32 = arith.constant 4 : i32
    %c2_i32_68 = arith.constant 2 : i32
    %154 = arith.muli %c4_i32, %c2_i32_68 : i32
    %155 = arith.index_cast %154 : i32 to index
    %c0_69 = arith.constant 0 : index
    %156 = vector.load %arg9[%155, %c0_69] : memref<16x128xf32, #tpu.memory_space<vmem>>, vector<2x128xf32>
    %c0_70 = arith.constant 0 : index
    %c0_71 = arith.constant 0 : index
    %157 = vector.load %arg5[%c0_70, %c0_71] : memref<32x128xf32, #tpu.memory_space<vmem>>, vector<32x128xf32>
    %cst_72 = arith.constant dense<0.000000e+00> : vector<2x128xf32>
    %158 = tpu.matmul %150, %157, %cst_72 {dimension_numbers = #tpu.dot_dimension_numbers<[1], [0], [0], [1], [0, 0, 1, 1], [], []>} : vector<2x32xf32>, vector<32x128xf32>, vector<2x128xf32> -> vector<2x128xf32>
    %159 = arith.addf %156, %158 : vector<2x128xf32>
    %160 = vector.broadcast %19 : vector<1x128xf32> to vector<2x128xf32>
    %161 = arith.mulf %159, %160 : vector<2x128xf32>
    %162 = math.tanh %161 : vector<2x128xf32>
    %163 = vector.extract_strided_slice %162 {offsets = [0, 0], sizes = [2, 32], strides = [1, 1]} : vector<2x128xf32> to vector<2x32xf32>
    %cst_73 = arith.constant 5.000000e-01 : f32
    %164 = vector.broadcast %cst_73 : f32 to vector<2x32xf32>
    %165 = arith.mulf %164, %163 : vector<2x32xf32>
    %cst_74 = arith.constant 5.000000e-01 : f32
    %166 = vector.broadcast %cst_74 : f32 to vector<2x32xf32>
    %167 = arith.addf %165, %166 : vector<2x32xf32>
    %168 = vector.extract_strided_slice %162 {offsets = [0, 32], sizes = [2, 32], strides = [1, 1]} : vector<2x128xf32> to vector<2x32xf32>
    %cst_75 = arith.constant 5.000000e-01 : f32
    %169 = vector.broadcast %cst_75 : f32 to vector<2x32xf32>
    %170 = arith.mulf %169, %168 : vector<2x32xf32>
    %cst_76 = arith.constant 5.000000e-01 : f32
    %171 = vector.broadcast %cst_76 : f32 to vector<2x32xf32>
    %172 = arith.addf %170, %171 : vector<2x32xf32>
    %173 = vector.extract_strided_slice %162 {offsets = [0, 64], sizes = [2, 32], strides = [1, 1]} : vector<2x128xf32> to vector<2x32xf32>
    %174 = vector.extract_strided_slice %162 {offsets = [0, 96], sizes = [2, 32], strides = [1, 1]} : vector<2x128xf32> to vector<2x32xf32>
    %cst_77 = arith.constant 5.000000e-01 : f32
    %175 = vector.broadcast %cst_77 : f32 to vector<2x32xf32>
    %176 = arith.mulf %175, %174 : vector<2x32xf32>
    %cst_78 = arith.constant 5.000000e-01 : f32
    %177 = vector.broadcast %cst_78 : f32 to vector<2x32xf32>
    %178 = arith.addf %176, %177 : vector<2x32xf32>
    %179 = arith.mulf %172, %148 : vector<2x32xf32>
    %180 = arith.mulf %167, %173 : vector<2x32xf32>
    %181 = arith.addf %179, %180 : vector<2x32xf32>
    %182 = math.tanh %181 : vector<2x32xf32>
    %183 = arith.mulf %178, %182 : vector<2x32xf32>
    %184 = vector.shape_cast %183 : vector<2x32xf32> to vector<2x1x32xf32>
    %c0_79 = arith.constant 0 : index
    %185 = arith.index_cast %c4_i32 : i32 to index
    %c0_80 = arith.constant 0 : index
    %186 = vector.load %arg6[%c0_79, %185, %c0_80] : memref<2x8x32xf32, #tpu.memory_space<vmem>>, vector<2x1x32xf32>
    tpu.vector_store %arg6[%c0_79, %185, %c0_80], %184 {strides = array<i32>} : memref<2x8x32xf32, #tpu.memory_space<vmem>>, vector<2x1x32xf32>,
    %c5_i32 = arith.constant 5 : i32
    %c2_i32_81 = arith.constant 2 : i32
    %187 = arith.muli %c5_i32, %c2_i32_81 : i32
    %188 = arith.index_cast %187 : i32 to index
    %c0_82 = arith.constant 0 : index
    %189 = vector.load %arg9[%188, %c0_82] : memref<16x128xf32, #tpu.memory_space<vmem>>, vector<2x128xf32>
    %c0_83 = arith.constant 0 : index
    %c0_84 = arith.constant 0 : index
    %190 = vector.load %arg5[%c0_83, %c0_84] : memref<32x128xf32, #tpu.memory_space<vmem>>, vector<32x128xf32>
    %cst_85 = arith.constant dense<0.000000e+00> : vector<2x128xf32>
    %191 = tpu.matmul %183, %190, %cst_85 {dimension_numbers = #tpu.dot_dimension_numbers<[1], [0], [0], [1], [0, 0, 1, 1], [], []>} : vector<2x32xf32>, vector<32x128xf32>, vector<2x128xf32> -> vector<2x128xf32>
    %192 = arith.addf %189, %191 : vector<2x128xf32>
    %193 = vector.broadcast %19 : vector<1x128xf32> to vector<2x128xf32>
    %194 = arith.mulf %192, %193 : vector<2x128xf32>
    %195 = math.tanh %194 : vector<2x128xf32>
    %196 = vector.extract_strided_slice %195 {offsets = [0, 0], sizes = [2, 32], strides = [1, 1]} : vector<2x128xf32> to vector<2x32xf32>
    %cst_86 = arith.constant 5.000000e-01 : f32
    %197 = vector.broadcast %cst_86 : f32 to vector<2x32xf32>
    %198 = arith.mulf %197, %196 : vector<2x32xf32>
    %cst_87 = arith.constant 5.000000e-01 : f32
    %199 = vector.broadcast %cst_87 : f32 to vector<2x32xf32>
    %200 = arith.addf %198, %199 : vector<2x32xf32>
    %201 = vector.extract_strided_slice %195 {offsets = [0, 32], sizes = [2, 32], strides = [1, 1]} : vector<2x128xf32> to vector<2x32xf32>
    %cst_88 = arith.constant 5.000000e-01 : f32
    %202 = vector.broadcast %cst_88 : f32 to vector<2x32xf32>
    %203 = arith.mulf %202, %201 : vector<2x32xf32>
    %cst_89 = arith.constant 5.000000e-01 : f32
    %204 = vector.broadcast %cst_89 : f32 to vector<2x32xf32>
    %205 = arith.addf %203, %204 : vector<2x32xf32>
    %206 = vector.extract_strided_slice %195 {offsets = [0, 64], sizes = [2, 32], strides = [1, 1]} : vector<2x128xf32> to vector<2x32xf32>
    %207 = vector.extract_strided_slice %195 {offsets = [0, 96], sizes = [2, 32], strides = [1, 1]} : vector<2x128xf32> to vector<2x32xf32>
    %cst_90 = arith.constant 5.000000e-01 : f32
    %208 = vector.broadcast %cst_90 : f32 to vector<2x32xf32>
    %209 = arith.mulf %208, %207 : vector<2x32xf32>
    %cst_91 = arith.constant 5.000000e-01 : f32
    %210 = vector.broadcast %cst_91 : f32 to vector<2x32xf32>
    %211 = arith.addf %209, %210 : vector<2x32xf32>
    %212 = arith.mulf %205, %181 : vector<2x32xf32>
    %213 = arith.mulf %200, %206 : vector<2x32xf32>
    %214 = arith.addf %212, %213 : vector<2x32xf32>
    %215 = math.tanh %214 : vector<2x32xf32>
    %216 = arith.mulf %211, %215 : vector<2x32xf32>
    %217 = vector.shape_cast %216 : vector<2x32xf32> to vector<2x1x32xf32>
    %c0_92 = arith.constant 0 : index
    %218 = arith.index_cast %c5_i32 : i32 to index
    %c0_93 = arith.constant 0 : index
    %219 = vector.load %arg6[%c0_92, %218, %c0_93] : memref<2x8x32xf32, #tpu.memory_space<vmem>>, vector<2x1x32xf32>
    tpu.vector_store %arg6[%c0_92, %218, %c0_93], %217 {strides = array<i32>} : memref<2x8x32xf32, #tpu.memory_space<vmem>>, vector<2x1x32xf32>,
    %c6_i32 = arith.constant 6 : i32
    %c2_i32_94 = arith.constant 2 : i32
    %220 = arith.muli %c6_i32, %c2_i32_94 : i32
    %221 = arith.index_cast %220 : i32 to index
    %c0_95 = arith.constant 0 : index
    %222 = vector.load %arg9[%221, %c0_95] : memref<16x128xf32, #tpu.memory_space<vmem>>, vector<2x128xf32>
    %c0_96 = arith.constant 0 : index
    %c0_97 = arith.constant 0 : index
    %223 = vector.load %arg5[%c0_96, %c0_97] : memref<32x128xf32, #tpu.memory_space<vmem>>, vector<32x128xf32>
    %cst_98 = arith.constant dense<0.000000e+00> : vector<2x128xf32>
    %224 = tpu.matmul %216, %223, %cst_98 {dimension_numbers = #tpu.dot_dimension_numbers<[1], [0], [0], [1], [0, 0, 1, 1], [], []>} : vector<2x32xf32>, vector<32x128xf32>, vector<2x128xf32> -> vector<2x128xf32>
    %225 = arith.addf %222, %224 : vector<2x128xf32>
    %226 = vector.broadcast %19 : vector<1x128xf32> to vector<2x128xf32>
    %227 = arith.mulf %225, %226 : vector<2x128xf32>
    %228 = math.tanh %227 : vector<2x128xf32>
    %229 = vector.extract_strided_slice %228 {offsets = [0, 0], sizes = [2, 32], strides = [1, 1]} : vector<2x128xf32> to vector<2x32xf32>
    %cst_99 = arith.constant 5.000000e-01 : f32
    %230 = vector.broadcast %cst_99 : f32 to vector<2x32xf32>
    %231 = arith.mulf %230, %229 : vector<2x32xf32>
    %cst_100 = arith.constant 5.000000e-01 : f32
    %232 = vector.broadcast %cst_100 : f32 to vector<2x32xf32>
    %233 = arith.addf %231, %232 : vector<2x32xf32>
    %234 = vector.extract_strided_slice %228 {offsets = [0, 32], sizes = [2, 32], strides = [1, 1]} : vector<2x128xf32> to vector<2x32xf32>
    %cst_101 = arith.constant 5.000000e-01 : f32
    %235 = vector.broadcast %cst_101 : f32 to vector<2x32xf32>
    %236 = arith.mulf %235, %234 : vector<2x32xf32>
    %cst_102 = arith.constant 5.000000e-01 : f32
    %237 = vector.broadcast %cst_102 : f32 to vector<2x32xf32>
    %238 = arith.addf %236, %237 : vector<2x32xf32>
    %239 = vector.extract_strided_slice %228 {offsets = [0, 64], sizes = [2, 32], strides = [1, 1]} : vector<2x128xf32> to vector<2x32xf32>
    %240 = vector.extract_strided_slice %228 {offsets = [0, 96], sizes = [2, 32], strides = [1, 1]} : vector<2x128xf32> to vector<2x32xf32>
    %cst_103 = arith.constant 5.000000e-01 : f32
    %241 = vector.broadcast %cst_103 : f32 to vector<2x32xf32>
    %242 = arith.mulf %241, %240 : vector<2x32xf32>
    %cst_104 = arith.constant 5.000000e-01 : f32
    %243 = vector.broadcast %cst_104 : f32 to vector<2x32xf32>
    %244 = arith.addf %242, %243 : vector<2x32xf32>
    %245 = arith.mulf %238, %214 : vector<2x32xf32>
    %246 = arith.mulf %233, %239 : vector<2x32xf32>
    %247 = arith.addf %245, %246 : vector<2x32xf32>
    %248 = math.tanh %247 : vector<2x32xf32>
    %249 = arith.mulf %244, %248 : vector<2x32xf32>
    %250 = vector.shape_cast %249 : vector<2x32xf32> to vector<2x1x32xf32>
    %c0_105 = arith.constant 0 : index
    %251 = arith.index_cast %c6_i32 : i32 to index
    %c0_106 = arith.constant 0 : index
    %252 = vector.load %arg6[%c0_105, %251, %c0_106] : memref<2x8x32xf32, #tpu.memory_space<vmem>>, vector<2x1x32xf32>
    tpu.vector_store %arg6[%c0_105, %251, %c0_106], %250 {strides = array<i32>} : memref<2x8x32xf32, #tpu.memory_space<vmem>>, vector<2x1x32xf32>,
    %c7_i32 = arith.constant 7 : i32
    %c2_i32_107 = arith.constant 2 : i32
    %253 = arith.muli %c7_i32, %c2_i32_107 : i32
    %254 = arith.index_cast %253 : i32 to index
    %c0_108 = arith.constant 0 : index
    %255 = vector.load %arg9[%254, %c0_108] : memref<16x128xf32, #tpu.memory_space<vmem>>, vector<2x128xf32>
    %c0_109 = arith.constant 0 : index
    %c0_110 = arith.constant 0 : index
    %256 = vector.load %arg5[%c0_109, %c0_110] : memref<32x128xf32, #tpu.memory_space<vmem>>, vector<32x128xf32>
    %cst_111 = arith.constant dense<0.000000e+00> : vector<2x128xf32>
    %257 = tpu.matmul %249, %256, %cst_111 {dimension_numbers = #tpu.dot_dimension_numbers<[1], [0], [0], [1], [0, 0, 1, 1], [], []>} : vector<2x32xf32>, vector<32x128xf32>, vector<2x128xf32> -> vector<2x128xf32>
    %258 = arith.addf %255, %257 : vector<2x128xf32>
    %259 = vector.broadcast %19 : vector<1x128xf32> to vector<2x128xf32>
    %260 = arith.mulf %258, %259 : vector<2x128xf32>
    %261 = math.tanh %260 : vector<2x128xf32>
    %262 = vector.extract_strided_slice %261 {offsets = [0, 0], sizes = [2, 32], strides = [1, 1]} : vector<2x128xf32> to vector<2x32xf32>
    %cst_112 = arith.constant 5.000000e-01 : f32
    %263 = vector.broadcast %cst_112 : f32 to vector<2x32xf32>
    %264 = arith.mulf %263, %262 : vector<2x32xf32>
    %cst_113 = arith.constant 5.000000e-01 : f32
    %265 = vector.broadcast %cst_113 : f32 to vector<2x32xf32>
    %266 = arith.addf %264, %265 : vector<2x32xf32>
    %267 = vector.extract_strided_slice %261 {offsets = [0, 32], sizes = [2, 32], strides = [1, 1]} : vector<2x128xf32> to vector<2x32xf32>
    %cst_114 = arith.constant 5.000000e-01 : f32
    %268 = vector.broadcast %cst_114 : f32 to vector<2x32xf32>
    %269 = arith.mulf %268, %267 : vector<2x32xf32>
    %cst_115 = arith.constant 5.000000e-01 : f32
    %270 = vector.broadcast %cst_115 : f32 to vector<2x32xf32>
    %271 = arith.addf %269, %270 : vector<2x32xf32>
    %272 = vector.extract_strided_slice %261 {offsets = [0, 64], sizes = [2, 32], strides = [1, 1]} : vector<2x128xf32> to vector<2x32xf32>
    %273 = vector.extract_strided_slice %261 {offsets = [0, 96], sizes = [2, 32], strides = [1, 1]} : vector<2x128xf32> to vector<2x32xf32>
    %cst_116 = arith.constant 5.000000e-01 : f32
    %274 = vector.broadcast %cst_116 : f32 to vector<2x32xf32>
    %275 = arith.mulf %274, %273 : vector<2x32xf32>
    %cst_117 = arith.constant 5.000000e-01 : f32
    %276 = vector.broadcast %cst_117 : f32 to vector<2x32xf32>
    %277 = arith.addf %275, %276 : vector<2x32xf32>
    %278 = arith.mulf %271, %247 : vector<2x32xf32>
    %279 = arith.mulf %266, %272 : vector<2x32xf32>
    %280 = arith.addf %278, %279 : vector<2x32xf32>
    %281 = math.tanh %280 : vector<2x32xf32>
    %282 = arith.mulf %277, %281 : vector<2x32xf32>
    %283 = vector.shape_cast %282 : vector<2x32xf32> to vector<2x1x32xf32>
    %c0_118 = arith.constant 0 : index
    %284 = arith.index_cast %c7_i32 : i32 to index
    %c0_119 = arith.constant 0 : index
    %285 = vector.load %arg6[%c0_118, %284, %c0_119] : memref<2x8x32xf32, #tpu.memory_space<vmem>>, vector<2x1x32xf32>
    tpu.vector_store %arg6[%c0_118, %284, %c0_119], %283 {strides = array<i32>} : memref<2x8x32xf32, #tpu.memory_space<vmem>>, vector<2x1x32xf32>,
    %c8_i32 = arith.constant 8 : i32
    %c0_120 = arith.constant 0 : index
    %c0_121 = arith.constant 0 : index
    %286 = vector.load %arg10[%c0_120, %c0_121] : memref<2x32xf32, #tpu.memory_space<vmem>>, vector<2x32xf32>
    tpu.vector_store %arg10[%c0_120, %c0_121], %282 {strides = array<i32>} : memref<2x32xf32, #tpu.memory_space<vmem>>, vector<2x32xf32>,
    %c0_122 = arith.constant 0 : index
    %c0_123 = arith.constant 0 : index
    %287 = vector.load %arg11[%c0_122, %c0_123] : memref<2x32xf32, #tpu.memory_space<vmem>>, vector<2x32xf32>
    tpu.vector_store %arg11[%c0_122, %c0_123], %280 {strides = array<i32>} : memref<2x32xf32, #tpu.memory_space<vmem>>, vector<2x32xf32>,
    %c0_124 = arith.constant 0 : index
    %c0_125 = arith.constant 0 : index
    %288 = vector.load %arg7[%c0_124, %c0_125] : memref<2x32xf32, #tpu.memory_space<vmem>>, vector<2x32xf32>
    tpu.vector_store %arg7[%c0_124, %c0_125], %282 {strides = array<i32>} : memref<2x32xf32, #tpu.memory_space<vmem>>, vector<2x32xf32>,
    %c0_126 = arith.constant 0 : index
    %c0_127 = arith.constant 0 : index
    %289 = vector.load %arg8[%c0_126, %c0_127] : memref<2x32xf32, #tpu.memory_space<vmem>>, vector<2x32xf32>
    tpu.vector_store %arg8[%c0_126, %c0_127], %280 {strides = array<i32>} : memref<2x32xf32, #tpu.memory_space<vmem>>, vector<2x32xf32>,
    return
  }
  func.func @transform_0(%arg0: i32, %arg1: i32) -> (i32, i32, i32) {
    %c0_i32 = arith.constant 0 : i32
    %c0_i32_0 = arith.constant 0 : i32
    return %arg0, %arg1, %c0_i32 : i32, i32, i32
  }
  func.func @transform_1(%arg0: i32, %arg1: i32) -> (i32, i32) {
    %c0_i32 = arith.constant 0 : i32
    %c0_i32_0 = arith.constant 0 : i32
    %c0_i32_1 = arith.constant 0 : i32
    return %c0_i32, %c0_i32_0 : i32, i32
  }
  func.func @transform_2(%arg0: i32, %arg1: i32) -> (i32, i32) {
    %c0_i32 = arith.constant 0 : i32
    %c0_i32_0 = arith.constant 0 : i32
    %c0_i32_1 = arith.constant 0 : i32
    return %c0_i32, %c0_i32_0 : i32, i32
  }
  func.func @transform_3(%arg0: i32, %arg1: i32) -> (i32, i32) {
    %c0_i32 = arith.constant 0 : i32
    %c0_i32_0 = arith.constant 0 : i32
    %c0_i32_1 = arith.constant 0 : i32
    return %c0_i32, %c0_i32_0 : i32, i32
  }
  func.func @transform_4(%arg0: i32, %arg1: i32) -> (i32, i32, i32) {
    %c0_i32 = arith.constant 0 : i32
    %c0_i32_0 = arith.constant 0 : i32
    return %arg0, %arg1, %c0_i32 : i32, i32, i32
  }
  func.func @transform_5(%arg0: i32, %arg1: i32) -> (i32, i32) {
    %c0_i32 = arith.constant 0 : i32
    %c0_i32_0 = arith.constant 0 : i32
    return %arg0, %c0_i32 : i32, i32
  }
  func.func @transform_6(%arg0: i32, %arg1: i32) -> (i32, i32) {
    %c0_i32 = arith.constant 0 : i32
    %c0_i32_0 = arith.constant 0 : i32
    return %arg0, %c0_i32 : i32, i32
  }
}

</mosaic_0001>

<llo_original>
// kernel: tpu_custom_call.1
$region0: #{tpu_custom_call.1}
  #allocation0 [shape = 'u32[]', space=smem, size = 0x4, offset = 0x4, fixed_abs, tag = 'smem constant byte address 0x4 - core index']
  #allocation1 [shape = 'u32[144,128]{1,0:T(1,128)}', space=vmem, size = 0x12000, scoped, tag = 'internal scratch']
  #allocation2 [shape = 'f32[16,128]{1,0:T(8,128)}', space=vmem, size = 0x2000, scoped, tag = 'scratch operand']
  #allocation3 [shape = 'f32[2,32]{1,0:T(2,128)}', space=vmem, size = 0x400, scoped, tag = 'scratch operand']
  #allocation4 [shape = 'f32[2,32]{1,0:T(2,128)}', space=vmem, size = 0x400, scoped, tag = 'scratch operand']
  %s0 = inlined_call_operand.hbm [shape: f32[1,16,16], index: 0, kind: input, shape index: {}]
  %s1 = inlined_call_operand.hbm [shape: f32[16,128], index: 1, kind: input, shape index: {}]
  %s2 = inlined_call_operand.vmem [shape: f32[1,128], index: 2, kind: input, shape index: {}]
  %s3 = inlined_call_operand.hbm [shape: f32[32,128], index: 3, kind: input, shape index: {}]
  %s4 = inlined_call_operand.hbm [shape: f32[2,8,32], index: 4, kind: output, shape index: {0}]
  %s5 = inlined_call_operand.hbm [shape: f32[2,32], index: 5, kind: output, shape index: {1}]
  %s6 = inlined_call_operand.hbm [shape: f32[2,32], index: 6, kind: output, shape index: {2}]
  %7 = xla_tuple %s4, %s5, %s6
  %s8 = sld [smem:[#allocation0]]
  $region58: #{tpu_custom_call.1} parent=0
    _
  %s10 = ssub.s32 1, %s8
  %s11 = scalar_select 0, %s10, %s8
  $region1: #{tpu_custom_call.1} parent=0
    #allocation5 [shape = 'u8[8192]{0}', space=vmem, size = 0x2000, scoped, tag = 'input window, operand 0, single buffered']
    #allocation6 [shape = 's32[1]{0}', space=sflag, size = 0x4, scoped, tag = 'scoped memory for tpu_custom_call.1']
    #allocation7 [shape = 's32[1]{0}', space=sflag, size = 0x4, scoped, tag = 'scoped memory for tpu_custom_call.1']
    #allocation8 [shape = 'u8[8192]{0}', space=vmem, size = 0x2000, scoped, tag = 'input window, operand 1, single buffered']
    #allocation9 [shape = 's32[1]{0}', space=sflag, size = 0x4, scoped, tag = 'scoped memory for tpu_custom_call.1']
    #allocation10 [shape = 'u8[16384]{0}', space=vmem, size = 0x4000, scoped, tag = 'input window, operand 3, single buffered']
    #allocation11 [shape = 'u8[8192]{0}', space=vmem, size = 0x2000, scoped, tag = 'output window, operand 0, single buffered']
    #allocation12 [shape = 'u8[1024]{0}', space=vmem, size = 0x400, scoped, tag = 'output window, operand 1, single buffered']
    #allocation13 [shape = 's32[1]{0}', space=sflag, size = 0x4, scoped, tag = 'scoped memory for tpu_custom_call.1']
    #allocation14 [shape = 'u8[1024]{0}', space=vmem, size = 0x400, scoped, tag = 'output window, operand 2, single buffered']
    %12 = vsyncpa [#allocation6], 0
    %13 = vsyncpa [#allocation9], 0
    %14 = vsyncpa [#allocation7], 0
    %15 = vsyncpa [#allocation13], 0
    // Predicated region
    $region2: #{tpu_custom_call.1} parent=1 // pred_check
      _
    $region3: #{tpu_custom_call.1} parent=1 // pred_check_branch
      %17 = sbr.rel (0) target = $region5
    $region4: #{tpu_custom_call.1} parent=1 // pred_region
      %s19 = ssub.s32 256, 256
      %20 = vsyncadd [#allocation6], %s19
      %s21 = sshll.u32 [#allocation5], 4
      %s22 = int_to_ptr.vmem [resolvable:$true] %s21
      %27 = dma.hbm_to_vmem [thread:$0]  %s0, 256, %s22, [#allocation6], 128, 128, 8
    $region5: #{tpu_custom_call.1} parent=1 // pred_fallthru
      _
    // Predicated region
    $region6: #{tpu_custom_call.1} parent=1 // pred_check
      _
    $region7: #{tpu_custom_call.1} parent=1 // pred_check_branch
      %29 = sbr.rel (0) target = $region9
    $region8: #{tpu_custom_call.1} parent=1 // pred_region
      %s31 = ssub.s32 256, 256
      %32 = vsyncadd [#allocation9], %s31
      %s33 = sshll.u32 [#allocation8], 4
      %s34 = int_to_ptr.vmem [resolvable:$true] %s33
      %39 = dma.hbm_to_vmem [thread:$0]  %s1, 256, %s34, [#allocation9], 128, 128, 8
    $region9: #{tpu_custom_call.1} parent=1 // pred_fallthru
      _
    // Predicated region
    $region10: #{tpu_custom_call.1} parent=1 // pred_check
      _
    $region11: #{tpu_custom_call.1} parent=1 // pred_check_branch
      %41 = sbr.rel (0) target = $region13
    $region12: #{tpu_custom_call.1} parent=1 // pred_region
      _
    $region13: #{tpu_custom_call.1} parent=1 // pred_fallthru
      _
    // Predicated region
    $region14: #{tpu_custom_call.1} parent=1 // pred_check
      _
    $region15: #{tpu_custom_call.1} parent=1 // pred_check_branch
      %43 = sbr.rel (0) target = $region17
    $region16: #{tpu_custom_call.1} parent=1 // pred_region
      %s45 = ssub.s32 512, 512
      %46 = vsyncadd [#allocation9], %s45
      %s47 = sshll.u32 [#allocation10], 4
      %s48 = int_to_ptr.vmem [resolvable:$true] %s47
      %53 = dma.hbm_to_vmem [thread:$0]  %s3, 512, %s48, [#allocation9], 128, 128, 8
    $region17: #{tpu_custom_call.1} parent=1 // pred_fallthru
      _
    // Predicated region
    $region18: #{tpu_custom_call.1} parent=1 // pred_check
      _
    $region19: #{tpu_custom_call.1} parent=1 // pred_check_branch
      %55 = sbr.rel (0) target = $region21
    $region20: #{tpu_custom_call.1} parent=1 // pred_region
      %56 = dma.done [#allocation6], 256
    $region21: #{tpu_custom_call.1} parent=1 // pred_fallthru
      _
    // Predicated region
    $region22: #{tpu_custom_call.1} parent=1 // pred_check
      _
    $region23: #{tpu_custom_call.1} parent=1 // pred_check_branch
      %58 = sbr.rel (0) target = $region25
    $region24: #{tpu_custom_call.1} parent=1 // pred_region
      %59 = dma.done [#allocation9], 256
    $region25: #{tpu_custom_call.1} parent=1 // pred_fallthru
      _
    // Predicated region
    $region26: #{tpu_custom_call.1} parent=1 // pred_check
      _
    $region27: #{tpu_custom_call.1} parent=1 // pred_check_branch
      %61 = sbr.rel (0) target = $region29
    $region28: #{tpu_custom_call.1} parent=1 // pred_region
      %62 = dma.done [#allocation9], 512
    $region29: #{tpu_custom_call.1} parent=1 // pred_fallthru
      _
    %p63 = scmp.eq.s32.totalorder 0, 0
    // Predicated region
    $region30: #{tpu_custom_call.1} parent=1 // pred_check
      %p64 = pneg %p63
    $region31: #{tpu_custom_call.1} parent=1 // pred_check_branch
      %66 = sbr.rel (%p64) target = $region33
    $region32: #{tpu_custom_call.1} parent=1 // pred_region
      %vm67 = vcmask 254976
      %68 = vst.msk [vmem:[#allocation3] sm:$0x3] %vm67, 0.0
      %69 = vst.msk [vmem:[#allocation4] sm:$0x3] %vm67, 0.0
    $region33: #{tpu_custom_call.1} parent=1 // pred_fallthru
      _
    %v70 = vld [vmem:[#allocation5] sm:$0xff]
    %v71 = vld [vmem:[#allocation5 + $0x8] sm:$0xff]
    %v72 = vld [vmem:[#allocation8] sm:$0xff]
    %v73 = vld [vmem:[#allocation8 + $0x8] sm:$0xff]
    %v74 = vld [vmem:[%s2] sm:$0x1]
    %v76 = vlaneseq
    %v77 = vshrl.u32 %v76, 7
    %v78 = vsub.s32 0, %v77
    %v79 = vrot.slane %v74, %v78
    %vm81 = vcmask 130048
    %v83 = vsel %vm81, %v70, 0
    %v86 = vsel %vm81, %v71, 0
    %88 = vmatprep.subr.mxu0 0.0
    %89 = vmatpush1.msra.mxu0 %v72
    %90 = vmatprep.subr.mxu0 0.0
    %91 = vmatpush1.msra.mxu0 %v73
    %92 = vmatprep.subr.mxu0 0.0
    %93 = vmatpush1.msra.mxu0 0.0
    %94 = vmatprep.subr.mxu0 0.0
    %95 = vmatpush1.msra.mxu0 0.0
    %96 = vmatprep.subr.mxu0 0.0
    %97 = vmatpush1.msra.mxu0 0.0
    %98 = vmatprep.subr.mxu0 0.0
    %99 = vmatpush1.msra.mxu0 0.0
    %100 = vmatprep.subr.mxu0 0.0
    %101 = vmatpush1.msra.mxu0 0.0
    %102 = vmatprep.subr.mxu0 0.0
    %103 = vmatpush1.msra.mxu0 0.0
    %104 = vmatprep.subr.mxu0 0.0
    %105 = vmatpush1.msra.mxu0 0.0
    %106 = vmatprep.subr.mxu0 0.0
    %107 = vmatpush1.msra.mxu0 0.0
    %108 = vmatprep.subr.mxu0 0.0
    %109 = vmatpush1.msra.mxu0 0.0
    %110 = vmatprep.subr.mxu0 0.0
    %111 = vmatpush1.msra.mxu0 0.0
    %112 = vmatprep.subr.mxu0 0.0
    %113 = vmatpush1.msra.mxu0 0.0
    %114 = vmatprep.subr.mxu0 0.0
    %115 = vmatpush1.msra.mxu0 0.0
    %116 = vmatprep.subr.mxu0 0.0
    %117 = vmatpush1.msra.mxu0 0.0
    %118 = vmatprep.subr.mxu0 0.0
    %119 = vmatpush1.msra.mxu0 0.0
    %120 = vmatprep.subr.mxu0 0.0
    %121 = vmatpush1.msra.mxu0 0.0
    %122 = vmatprep.subr.mxu0 0.0
    %123 = vmatpush1.msra.mxu0 0.0
    %124 = vmatprep.subr.mxu0 0.0
    %125 = vmatpush1.msra.mxu0 0.0
    %126 = vmatprep.subr.mxu0 0.0
    %127 = vmatpush1.msra.mxu0 0.0
    %128 = vmatprep.subr.mxu0 0.0
    %129 = vmatpush1.msra.mxu0 0.0
    %130 = vmatprep.subr.mxu0 0.0
    %131 = vmatpush1.msra.mxu0 0.0
    %132 = vmatprep.subr.mxu0 0.0
    %133 = vmatpush1.msra.mxu0 0.0
    %134 = vmatprep.subr.mxu0 0.0
    %135 = vmatpush1.msra.mxu0 0.0
    %136 = vmatprep.subr.mxu0 0.0
    %137 = vmatpush1.msra.mxu0 0.0
    %138 = vmatprep.subr.mxu0 0.0
    %139 = vmatpush1.msra.mxu0 0.0
    %140 = vmatprep.subr.mxu0 0.0
    %141 = vmatpush1.msra.mxu0 0.0
    %142 = vmatprep.subr.mxu0 0.0
    %143 = vmatpush1.msra.mxu0 0.0
    %144 = vmatprep.subr.mxu0 0.0
    %145 = vmatpush1.msra.mxu0 0.0
    %146 = vmatprep.subr.mxu0 0.0
    %147 = vmatpush1.msra.mxu0 0.0
    %148 = vmatprep.subr.mxu0 0.0
    %149 = vmatpush1.msra.mxu0 0.0
    %150 = vmatprep.subr.mxu0 0.0
    %151 = vmatpush1.msra.mxu0 0.0
    %152 = vmatprep.mubr.f32.mxu0 0.0
    %153 = vmatmul.mubr.f32.gmra.mrb[0].mxu0 %v83
    %v154 = vpop.f32.mrb[0].mxu0
    %v155 = vadd.f32 %v79, %v154
    %v156 = vpop.f32.mrb[0].mxu0
    %157 = vmatprep.mubr.f32.mxu0 0.0
    %158 = vmatmul.mubr.f32.gmra.mrb[0].mxu0 %v86
    %v159 = vpop.f32.mrb[0].mxu0
    %v160 = vadd.f32 %v79, %v159
    %v161 = vpop.f32.mrb[0].mxu0
    %162 = vdwg.mxu0
    %163 = vst [vmem:[#allocation2] sm:$0xff] %v155
    %164 = vst [vmem:[#allocation2 + $0x8] sm:$0xff] %v160
    %v165 = vlaneseq
    %v166 = vand.u32 %v165, 127
    %vm167 = vcmp.ge.s32.totalorder %v166, 64
    %vm168 = vcmp.lt.s32.totalorder %v166, 96
    %vm169 = vmand %vm167, %vm168
    %v170 = vsel %vm169, 1.0, 0.5
    %v171 = vld [vmem:[#allocation3] sm:$0x3]
    %v172 = vld [vmem:[#allocation4] sm:$0x3]
    %v173 = vld [vmem:[#allocation2] sm:$0x3]
    %v174 = vld [vmem:[#allocation10] sm:$0xff]
    %v175 = vld [vmem:[#allocation10 + $0x8] sm:$0xff]
    %v176 = vld [vmem:[#allocation10 + $0x10] sm:$0xff]
    %v177 = vld [vmem:[#allocation10 + $0x18] sm:$0xff]
    %vm178 = vcmask 261120
    %v180 = vsel %vm178, %v171, 0
    %182 = vmatprep.subr.mxu0 0.0
    %183 = vmatpush1.msra.mxu0 %v174
    %184 = vmatprep.subr.mxu0 0.0
    %185 = vmatpush1.msra.mxu0 %v175
    %186 = vmatprep.subr.mxu0 0.0
    %187 = vmatpush1.msra.mxu0 %v176
    %188 = vmatprep.subr.mxu0 0.0
    %189 = vmatpush1.msra.mxu0 %v177
    %190 = vmatprep.subr.mxu0 0.0
    %191 = vmatpush1.msra.mxu0 0.0
    %192 = vmatprep.subr.mxu0 0.0
    %193 = vmatpush1.msra.mxu0 0.0
    %194 = vmatprep.subr.mxu0 0.0
    %195 = vmatpush1.msra.mxu0 0.0
    %196 = vmatprep.subr.mxu0 0.0
    %197 = vmatpush1.msra.mxu0 0.0
    %198 = vmatprep.subr.mxu0 0.0
    %199 = vmatpush1.msra.mxu0 0.0
    %200 = vmatprep.subr.mxu0 0.0
    %201 = vmatpush1.msra.mxu0 0.0
    %202 = vmatprep.subr.mxu0 0.0
    %203 = vmatpush1.msra.mxu0 0.0
    %204 = vmatprep.subr.mxu0 0.0
    %205 = vmatpush1.msra.mxu0 0.0
    %206 = vmatprep.subr.mxu0 0.0
    %207 = vmatpush1.msra.mxu0 0.0
    %208 = vmatprep.subr.mxu0 0.0
    %209 = vmatpush1.msra.mxu0 0.0
    %210 = vmatprep.subr.mxu0 0.0
    %211 = vmatpush1.msra.mxu0 0.0
    %212 = vmatprep.subr.mxu0 0.0
    %213 = vmatpush1.msra.mxu0 0.0
    %214 = vmatprep.subr.mxu0 0.0
    %215 = vmatpush1.msra.mxu0 0.0
    %216 = vmatprep.subr.mxu0 0.0
    %217 = vmatpush1.msra.mxu0 0.0
    %218 = vmatprep.subr.mxu0 0.0
    %219 = vmatpush1.msra.mxu0 0.0
    %220 = vmatprep.subr.mxu0 0.0
    %221 = vmatpush1.msra.mxu0 0.0
    %222 = vmatprep.subr.mxu0 0.0
    %223 = vmatpush1.msra.mxu0 0.0
    %224 = vmatprep.subr.mxu0 0.0
    %225 = vmatpush1.msra.mxu0 0.0
    %226 = vmatprep.subr.mxu0 0.0
    %227 = vmatpush1.msra.mxu0 0.0
    %228 = vmatprep.subr.mxu0 0.0
    %229 = vmatpush1.msra.mxu0 0.0
    %230 = vmatprep.subr.mxu0 0.0
    %231 = vmatpush1.msra.mxu0 0.0
    %232 = vmatprep.subr.mxu0 0.0
    %233 = vmatpush1.msra.mxu0 0.0
    %234 = vmatprep.subr.mxu0 0.0
    %235 = vmatpush1.msra.mxu0 0.0
    %236 = vmatprep.subr.mxu0 0.0
    %237 = vmatpush1.msra.mxu0 0.0
    %238 = vmatprep.subr.mxu0 0.0
    %239 = vmatpush1.msra.mxu0 0.0
    %240 = vmatprep.subr.mxu0 0.0
    %241 = vmatpush1.msra.mxu0 0.0
    %242 = vmatprep.subr.mxu0 0.0
    %243 = vmatpush1.msra.mxu0 0.0
    %244 = vmatprep.subr.mxu0 0.0
    %245 = vmatpush1.msra.mxu0 0.0
    %246 = vmatprep.mubr.f32.mxu0 0.0
    %247 = vmatmul.mubr.f32.gmra.mrb[0].mxu0 %v180
    %v248 = vpop.f32.mrb[0].mxu0
    %v249 = vadd.f32 0.0, %v248
    %v250 = vpop.f32.mrb[0].mxu0
    %251 = vdwg.mxu0
    %v252 = vadd.f32 %v173, %v249
    %v253 = vmul.f32 %v252, %v170
    %v254 = vtanh.pop %v253
    %v255 = vmul.f32 %v254, 0.5
    %v256 = vadd.f32 %v255, 0.5
    %258 = vrot.lane.b32.xlu0 %v172, 32
    %v259 = vpop.permute.xlu0 %258
    %v261 = vmul.f32 %v256, %v259
    %263 = vrot.lane.b32.xlu0 %v254, 64
    %v264 = vpop.permute.xlu0 %263
    %v266 = vmul.f32 %v256, %v264
    %268 = vrot.lane.b32.xlu0 %v266, 32
    %v269 = vpop.permute.xlu0 %268
    %v271 = vadd.f32 %v261, %v269
    %v272 = vtanh.pop %v271
    %274 = vrot.lane.b32.xlu0 %v272, 64
    %v275 = vpop.permute.xlu0 %274
    %v277 = vmul.f32 %v256, %v275
    %v280 = vunpack.c.l.s4 1966171168
    %v281 = vunpack.c.0.s8 %v280
    %v282 = vlaneseq
    %v283 = vshrl.u32 %v282, 7
    %v284 = vsub.s32 %v281, %v283
    %v285 = vrot.slane %v277, %v284
    %v286 = vcombine.high %v285, %v285
    %v288 = vunpack.c.l.s4 1966171168
    %v289 = vunpack.c.0.s8 %v288
    %v290 = vlaneseq
    %v291 = vshrl.u32 %v290, 7
    %v292 = vsub.s32 %v289, %v291
    %v293 = vrot.slane %v285, %v292
    %v295 = vunpack.c.l.s4 1966171168
    %v296 = vunpack.c.0.s8 %v295
    %v297 = vlaneseq
    %v298 = vshrl.u32 %v297, 7
    %v299 = vsub.s32 %v296, %v298
    %v300 = vrot.slane %v286, %v299
    %v301 = vlaneseq
    %v302 = vshrl.u32 %v301, 7
    %v303 = vsub.s32 0, %v302
    %v304 = vrot.slane %v293, %v303
    %v305 = vlaneseq
    %v306 = vshrl.u32 %v305, 7
    %v307 = vsub.s32 0, %v306
    %v308 = vrot.slane %v300, %v307
    %309 = vrot.lane.b32.xlu0 %v304, 32
    %v310 = vpop.permute.xlu0 %309
    %311 = vrot.lane.b32.xlu0 %v308, 32
    %v312 = vpop.permute.xlu0 %311
    %vm315 = vcmask 253952
    %316 = vst.msk [vmem:[#allocation11] sm:$0x1] %vm315, %v310
    %317 = vst.msk [vmem:[#allocation11 + $0x8] sm:$0x1] %vm315, %v312
    %v318 = vld [vmem:[#allocation2 + $0x2] sm:$0x3]
    %v319 = vld [vmem:[#allocation10] sm:$0xff]
    %v320 = vld [vmem:[#allocation10 + $0x8] sm:$0xff]
    %v321 = vld [vmem:[#allocation10 + $0x10] sm:$0xff]
    %v322 = vld [vmem:[#allocation10 + $0x18] sm:$0xff]
    %323 = vrot.lane.b32.xlu0 %v277, 32
    %v324 = vpop.permute.xlu0 %323
    %v325 = vsel %vm178, %v324, 0
    %327 = vmatprep.subr.mxu0 0.0
    %328 = vmatpush1.msra.mxu0 %v319
    %329 = vmatprep.subr.mxu0 0.0
    %330 = vmatpush1.msra.mxu0 %v320
    %331 = vmatprep.subr.mxu0 0.0
    %332 = vmatpush1.msra.mxu0 %v321
    %333 = vmatprep.subr.mxu0 0.0
    %334 = vmatpush1.msra.mxu0 %v322
    %335 = vmatprep.subr.mxu0 0.0
    %336 = vmatpush1.msra.mxu0 0.0
    %337 = vmatprep.subr.mxu0 0.0
    %338 = vmatpush1.msra.mxu0 0.0
    %339 = vmatprep.subr.mxu0 0.0
    %340 = vmatpush1.msra.mxu0 0.0
    %341 = vmatprep.subr.mxu0 0.0
    %342 = vmatpush1.msra.mxu0 0.0
    %343 = vmatprep.subr.mxu0 0.0
    %344 = vmatpush1.msra.mxu0 0.0
    %345 = vmatprep.subr.mxu0 0.0
    %346 = vmatpush1.msra.mxu0 0.0
    %347 = vmatprep.subr.mxu0 0.0
    %348 = vmatpush1.msra.mxu0 0.0
    %349 = vmatprep.subr.mxu0 0.0
    %350 = vmatpush1.msra.mxu0 0.0
    %351 = vmatprep.subr.mxu0 0.0
    %352 = vmatpush1.msra.mxu0 0.0
    %353 = vmatprep.subr.mxu0 0.0
    %354 = vmatpush1.msra.mxu0 0.0
    %355 = vmatprep.subr.mxu0 0.0
    %356 = vmatpush1.msra.mxu0 0.0
    %357 = vmatprep.subr.mxu0 0.0
    %358 = vmatpush1.msra.mxu0 0.0
    %359 = vmatprep.subr.mxu0 0.0
    %360 = vmatpush1.msra.mxu0 0.0
    %361 = vmatprep.subr.mxu0 0.0
    %362 = vmatpush1.msra.mxu0 0.0
    %363 = vmatprep.subr.mxu0 0.0
    %364 = vmatpush1.msra.mxu0 0.0
    %365 = vmatprep.subr.mxu0 0.0
    %366 = vmatpush1.msra.mxu0 0.0
    %367 = vmatprep.subr.mxu0 0.0
    %368 = vmatpush1.msra.mxu0 0.0
    %369 = vmatprep.subr.mxu0 0.0
    %370 = vmatpush1.msra.mxu0 0.0
    %371 = vmatprep.subr.mxu0 0.0
    %372 = vmatpush1.msra.mxu0 0.0
    %373 = vmatprep.subr.mxu0 0.0
    %374 = vmatpush1.msra.mxu0 0.0
    %375 = vmatprep.subr.mxu0 0.0
    %376 = vmatpush1.msra.mxu0 0.0
    %377 = vmatprep.subr.mxu0 0.0
    %378 = vmatpush1.msra.mxu0 0.0
    %379 = vmatprep.subr.mxu0 0.0
    %380 = vmatpush1.msra.mxu0 0.0
    %381 = vmatprep.subr.mxu0 0.0
    %382 = vmatpush1.msra.mxu0 0.0
    %383 = vmatprep.subr.mxu0 0.0
    %384 = vmatpush1.msra.mxu0 0.0
    %385 = vmatprep.subr.mxu0 0.0
    %386 = vmatpush1.msra.mxu0 0.0
    %387 = vmatprep.subr.mxu0 0.0
    %388 = vmatpush1.msra.mxu0 0.0
    %389 = vmatprep.subr.mxu0 0.0
    %390 = vmatpush1.msra.mxu0 0.0
    %391 = vmatprep.mubr.f32.mxu0 0.0
    %392 = vmatmul.mubr.f32.gmra.mrb[0].mxu0 %v325
    %v393 = vpop.f32.mrb[0].mxu0
    %v394 = vadd.f32 0.0, %v393
    %v395 = vpop.f32.mrb[0].mxu0
    %396 = vdwg.mxu0
    %v397 = vadd.f32 %v318, %v394
    %v398 = vmul.f32 %v397, %v170
    %v399 = vtanh.pop %v398
    %v400 = vmul.f32 %v399, 0.5
    %v401 = vadd.f32 %v400, 0.5
    %v402 = vmul.f32 %v401, %v271
    %404 = vrot.lane.b32.xlu0 %v399, 64
    %v405 = vpop.permute.xlu0 %404
    %v407 = vmul.f32 %v401, %v405
    %409 = vrot.lane.b32.xlu0 %v407, 32
    %v410 = vpop.permute.xlu0 %409
    %v412 = vadd.f32 %v402, %v410
    %v413 = vtanh.pop %v412
    %415 = vrot.lane.b32.xlu0 %v413, 64
    %v416 = vpop.permute.xlu0 %415
    %v418 = vmul.f32 %v401, %v416
    %v421 = vunpack.c.l.s4 1966171168
    %v422 = vunpack.c.0.s8 %v421
    %v423 = vlaneseq
    %v424 = vshrl.u32 %v423, 7
    %v425 = vsub.s32 %v422, %v424
    %v426 = vrot.slane %v418, %v425
    %v427 = vcombine.high %v426, %v426
    %v429 = vunpack.c.l.s4 1966171168
    %v430 = vunpack.c.0.s8 %v429
    %v431 = vlaneseq
    %v432 = vshrl.u32 %v431, 7
    %v433 = vsub.s32 %v430, %v432
    %v434 = vrot.slane %v426, %v433
    %v436 = vunpack.c.l.s4 1966171168
    %v437 = vunpack.c.0.s8 %v436
    %v438 = vlaneseq
    %v439 = vshrl.u32 %v438, 7
    %v440 = vsub.s32 %v437, %v439
    %v441 = vrot.slane %v427, %v440
    %v442 = vlaneseq
    %v443 = vshrl.u32 %v442, 7
    %v444 = vsub.s32 0, %v443
    %v445 = vrot.slane %v434, %v444
    %v446 = vlaneseq
    %v447 = vshrl.u32 %v446, 7
    %v448 = vsub.s32 0, %v447
    %v449 = vrot.slane %v441, %v448
    %450 = vrot.lane.b32.xlu0 %v445, 32
    %v451 = vpop.permute.xlu0 %450
    %452 = vrot.lane.b32.xlu0 %v449, 32
    %v453 = vpop.permute.xlu0 %452
    %456 = vst.msk [vmem:[#allocation11 + $0x1] sm:$0x1] %vm315, %v451
    %457 = vst.msk [vmem:[#allocation11 + $0x9] sm:$0x1] %vm315, %v453
    %v458 = vld [vmem:[#allocation2 + $0x4] sm:$0x3]
    %v459 = vld [vmem:[#allocation10] sm:$0xff]
    %v460 = vld [vmem:[#allocation10 + $0x8] sm:$0xff]
    %v461 = vld [vmem:[#allocation10 + $0x10] sm:$0xff]
    %v462 = vld [vmem:[#allocation10 + $0x18] sm:$0xff]
    %463 = vrot.lane.b32.xlu0 %v418, 32
    %v464 = vpop.permute.xlu0 %463
    %v465 = vsel %vm178, %v464, 0
    %467 = vmatprep.subr.mxu0 0.0
    %468 = vmatpush1.msra.mxu0 %v459
    %469 = vmatprep.subr.mxu0 0.0
    %470 = vmatpush1.msra.mxu0 %v460
    %471 = vmatprep.subr.mxu0 0.0
    %472 = vmatpush1.msra.mxu0 %v461
    %473 = vmatprep.subr.mxu0 0.0
    %474 = vmatpush1.msra.mxu0 %v462
    %475 = vmatprep.subr.mxu0 0.0
    %476 = vmatpush1.msra.mxu0 0.0
    %477 = vmatprep.subr.mxu0 0.0
    %478 = vmatpush1.msra.mxu0 0.0
    %479 = vmatprep.subr.mxu0 0.0
    %480 = vmatpush1.msra.mxu0 0.0
    %481 = vmatprep.subr.mxu0 0.0
    %482 = vmatpush1.msra.mxu0 0.0
    %483 = vmatprep.subr.mxu0 0.0
    %484 = vmatpush1.msra.mxu0 0.0
    %485 = vmatprep.subr.mxu0 0.0
    %486 = vmatpush1.msra.mxu0 0.0
    %487 = vmatprep.subr.mxu0 0.0
    %488 = vmatpush1.msra.mxu0 0.0
    %489 = vmatprep.subr.mxu0 0.0
    %490 = vmatpush1.msra.mxu0 0.0
    %491 = vmatprep.subr.mxu0 0.0
    %492 = vmatpush1.msra.mxu0 0.0
    %493 = vmatprep.subr.mxu0 0.0
    %494 = vmatpush1.msra.mxu0 0.0
    %495 = vmatprep.subr.mxu0 0.0
    %496 = vmatpush1.msra.mxu0 0.0
    %497 = vmatprep.subr.mxu0 0.0
    %498 = vmatpush1.msra.mxu0 0.0
    %499 = vmatprep.subr.mxu0 0.0
    %500 = vmatpush1.msra.mxu0 0.0
    %501 = vmatprep.subr.mxu0 0.0
    %502 = vmatpush1.msra.mxu0 0.0
    %503 = vmatprep.subr.mxu0 0.0
    %504 = vmatpush1.msra.mxu0 0.0
    %505 = vmatprep.subr.mxu0 0.0
    %506 = vmatpush1.msra.mxu0 0.0
    %507 = vmatprep.subr.mxu0 0.0
    %508 = vmatpush1.msra.mxu0 0.0
    %509 = vmatprep.subr.mxu0 0.0
    %510 = vmatpush1.msra.mxu0 0.0
    %511 = vmatprep.subr.mxu0 0.0
    %512 = vmatpush1.msra.mxu0 0.0
    %513 = vmatprep.subr.mxu0 0.0
    %514 = vmatpush1.msra.mxu0 0.0
    %515 = vmatprep.subr.mxu0 0.0
    %516 = vmatpush1.msra.mxu0 0.0
    %517 = vmatprep.subr.mxu0 0.0
    %518 = vmatpush1.msra.mxu0 0.0
    %519 = vmatprep.subr.mxu0 0.0
    %520 = vmatpush1.msra.mxu0 0.0
    %521 = vmatprep.subr.mxu0 0.0
    %522 = vmatpush1.msra.mxu0 0.0
    %523 = vmatprep.subr.mxu0 0.0
    %524 = vmatpush1.msra.mxu0 0.0
    %525 = vmatprep.subr.mxu0 0.0
    %526 = vmatpush1.msra.mxu0 0.0
    %527 = vmatprep.subr.mxu0 0.0
    %528 = vmatpush1.msra.mxu0 0.0
    %529 = vmatprep.subr.mxu0 0.0
    %530 = vmatpush1.msra.mxu0 0.0
    %531 = vmatprep.mubr.f32.mxu0 0.0
    %532 = vmatmul.mubr.f32.gmra.mrb[0].mxu0 %v465
    %v533 = vpop.f32.mrb[0].mxu0
    %v534 = vadd.f32 0.0, %v533
    %v535 = vpop.f32.mrb[0].mxu0
    %536 = vdwg.mxu0
    %v537 = vadd.f32 %v458, %v534
    %v538 = vmul.f32 %v537, %v170
    %v539 = vtanh.pop %v538
    %v540 = vmul.f32 %v539, 0.5
    %v541 = vadd.f32 %v540, 0.5
    %v542 = vmul.f32 %v541, %v412
    %544 = vrot.lane.b32.xlu0 %v539, 64
    %v545 = vpop.permute.xlu0 %544
    %v547 = vmul.f32 %v541, %v545
    %549 = vrot.lane.b32.xlu0 %v547, 32
    %v550 = vpop.permute.xlu0 %549
    %v552 = vadd.f32 %v542, %v550
    %v553 = vtanh.pop %v552
    %555 = vrot.lane.b32.xlu0 %v553, 64
    %v556 = vpop.permute.xlu0 %555
    %v558 = vmul.f32 %v541, %v556
    %v561 = vunpack.c.l.s4 1966171168
    %v562 = vunpack.c.0.s8 %v561
    %v563 = vlaneseq
    %v564 = vshrl.u32 %v563, 7
    %v565 = vsub.s32 %v562, %v564
    %v566 = vrot.slane %v558, %v565
    %v567 = vcombine.high %v566, %v566
    %v569 = vunpack.c.l.s4 1966171168
    %v570 = vunpack.c.0.s8 %v569
    %v571 = vlaneseq
    %v572 = vshrl.u32 %v571, 7
    %v573 = vsub.s32 %v570, %v572
    %v574 = vrot.slane %v566, %v573
    %v576 = vunpack.c.l.s4 1966171168
    %v577 = vunpack.c.0.s8 %v576
    %v578 = vlaneseq
    %v579 = vshrl.u32 %v578, 7
    %v580 = vsub.s32 %v577, %v579
    %v581 = vrot.slane %v567, %v580
    %v582 = vlaneseq
    %v583 = vshrl.u32 %v582, 7
    %v584 = vsub.s32 0, %v583
    %v585 = vrot.slane %v574, %v584
    %v586 = vlaneseq
    %v587 = vshrl.u32 %v586, 7
    %v588 = vsub.s32 0, %v587
    %v589 = vrot.slane %v581, %v588
    %590 = vrot.lane.b32.xlu0 %v585, 32
    %v591 = vpop.permute.xlu0 %590
    %592 = vrot.lane.b32.xlu0 %v589, 32
    %v593 = vpop.permute.xlu0 %592
    %596 = vst.msk [vmem:[#allocation11 + $0x2] sm:$0x1] %vm315, %v591
    %597 = vst.msk [vmem:[#allocation11 + $0xa] sm:$0x1] %vm315, %v593
    %v598 = vld [vmem:[#allocation2 + $0x6] sm:$0x3]
    %v599 = vld [vmem:[#allocation10] sm:$0xff]
    %v600 = vld [vmem:[#allocation10 + $0x8] sm:$0xff]
    %v601 = vld [vmem:[#allocation10 + $0x10] sm:$0xff]
    %v602 = vld [vmem:[#allocation10 + $0x18] sm:$0xff]
    %603 = vrot.lane.b32.xlu0 %v558, 32
    %v604 = vpop.permute.xlu0 %603
    %v605 = vsel %vm178, %v604, 0
    %607 = vmatprep.subr.mxu0 0.0
    %608 = vmatpush1.msra.mxu0 %v599
    %609 = vmatprep.subr.mxu0 0.0
    %610 = vmatpush1.msra.mxu0 %v600
    %611 = vmatprep.subr.mxu0 0.0
    %612 = vmatpush1.msra.mxu0 %v601
    %613 = vmatprep.subr.mxu0 0.0
    %614 = vmatpush1.msra.mxu0 %v602
    %615 = vmatprep.subr.mxu0 0.0
    %616 = vmatpush1.msra.mxu0 0.0
    %617 = vmatprep.subr.mxu0 0.0
    %618 = vmatpush1.msra.mxu0 0.0
    %619 = vmatprep.subr.mxu0 0.0
    %620 = vmatpush1.msra.mxu0 0.0
    %621 = vmatprep.subr.mxu0 0.0
    %622 = vmatpush1.msra.mxu0 0.0
    %623 = vmatprep.subr.mxu0 0.0
    %624 = vmatpush1.msra.mxu0 0.0
    %625 = vmatprep.subr.mxu0 0.0
    %626 = vmatpush1.msra.mxu0 0.0
    %627 = vmatprep.subr.mxu0 0.0
    %628 = vmatpush1.msra.mxu0 0.0
    %629 = vmatprep.subr.mxu0 0.0
    %630 = vmatpush1.msra.mxu0 0.0
    %631 = vmatprep.subr.mxu0 0.0
    %632 = vmatpush1.msra.mxu0 0.0
    %633 = vmatprep.subr.mxu0 0.0
    %634 = vmatpush1.msra.mxu0 0.0
    %635 = vmatprep.subr.mxu0 0.0
    %636 = vmatpush1.msra.mxu0 0.0
    %637 = vmatprep.subr.mxu0 0.0
    %638 = vmatpush1.msra.mxu0 0.0
    %639 = vmatprep.subr.mxu0 0.0
    %640 = vmatpush1.msra.mxu0 0.0
    %641 = vmatprep.subr.mxu0 0.0
    %642 = vmatpush1.msra.mxu0 0.0
    %643 = vmatprep.subr.mxu0 0.0
    %644 = vmatpush1.msra.mxu0 0.0
    %645 = vmatprep.subr.mxu0 0.0
    %646 = vmatpush1.msra.mxu0 0.0
    %647 = vmatprep.subr.mxu0 0.0
    %648 = vmatpush1.msra.mxu0 0.0
    %649 = vmatprep.subr.mxu0 0.0
    %650 = vmatpush1.msra.mxu0 0.0
    %651 = vmatprep.subr.mxu0 0.0
    %652 = vmatpush1.msra.mxu0 0.0
    %653 = vmatprep.subr.mxu0 0.0
    %654 = vmatpush1.msra.mxu0 0.0
    %655 = vmatprep.subr.mxu0 0.0
    %656 = vmatpush1.msra.mxu0 0.0
    %657 = vmatprep.subr.mxu0 0.0
    %658 = vmatpush1.msra.mxu0 0.0
    %659 = vmatprep.subr.mxu0 0.0
    %660 = vmatpush1.msra.mxu0 0.0
    %661 = vmatprep.subr.mxu0 0.0
    %662 = vmatpush1.msra.mxu0 0.0
    %663 = vmatprep.subr.mxu0 0.0
    %664 = vmatpush1.msra.mxu0 0.0
    %665 = vmatprep.subr.mxu0 0.0
    %666 = vmatpush1.msra.mxu0 0.0
    %667 = vmatprep.subr.mxu0 0.0
    %668 = vmatpush1.msra.mxu0 0.0
    %669 = vmatprep.subr.mxu0 0.0
    %670 = vmatpush1.msra.mxu0 0.0
    %671 = vmatprep.mubr.f32.mxu0 0.0
    %672 = vmatmul.mubr.f32.gmra.mrb[0].mxu0 %v605
    %v673 = vpop.f32.mrb[0].mxu0
    %v674 = vadd.f32 0.0, %v673
    %v675 = vpop.f32.mrb[0].mxu0
    %676 = vdwg.mxu0
    %v677 = vadd.f32 %v598, %v674
    %v678 = vmul.f32 %v677, %v170
    %v679 = vtanh.pop %v678
    %v680 = vmul.f32 %v679, 0.5
    %v681 = vadd.f32 %v680, 0.5
    %v682 = vmul.f32 %v681, %v552
    %684 = vrot.lane.b32.xlu0 %v679, 64
    %v685 = vpop.permute.xlu0 %684
    %v687 = vmul.f32 %v681, %v685
    %689 = vrot.lane.b32.xlu0 %v687, 32
    %v690 = vpop.permute.xlu0 %689
    %v692 = vadd.f32 %v682, %v690
    %v693 = vtanh.pop %v692
    %695 = vrot.lane.b32.xlu0 %v693, 64
    %v696 = vpop.permute.xlu0 %695
    %v698 = vmul.f32 %v681, %v696
    %v701 = vunpack.c.l.s4 1966171168
    %v702 = vunpack.c.0.s8 %v701
    %v703 = vlaneseq
    %v704 = vshrl.u32 %v703, 7
    %v705 = vsub.s32 %v702, %v704
    %v706 = vrot.slane %v698, %v705
    %v707 = vcombine.high %v706, %v706
    %v709 = vunpack.c.l.s4 1966171168
    %v710 = vunpack.c.0.s8 %v709
    %v711 = vlaneseq
    %v712 = vshrl.u32 %v711, 7
    %v713 = vsub.s32 %v710, %v712
    %v714 = vrot.slane %v706, %v713
    %v716 = vunpack.c.l.s4 1966171168
    %v717 = vunpack.c.0.s8 %v716
    %v718 = vlaneseq
    %v719 = vshrl.u32 %v718, 7
    %v720 = vsub.s32 %v717, %v719
    %v721 = vrot.slane %v707, %v720
    %v722 = vlaneseq
    %v723 = vshrl.u32 %v722, 7
    %v724 = vsub.s32 0, %v723
    %v725 = vrot.slane %v714, %v724
    %v726 = vlaneseq
    %v727 = vshrl.u32 %v726, 7
    %v728 = vsub.s32 0, %v727
    %v729 = vrot.slane %v721, %v728
    %730 = vrot.lane.b32.xlu0 %v725, 32
    %v731 = vpop.permute.xlu0 %730
    %732 = vrot.lane.b32.xlu0 %v729, 32
    %v733 = vpop.permute.xlu0 %732
    %736 = vst.msk [vmem:[#allocation11 + $0x3] sm:$0x1] %vm315, %v731
    %737 = vst.msk [vmem:[#allocation11 + $0xb] sm:$0x1] %vm315, %v733
    %v738 = vld [vmem:[#allocation2 + $0x8] sm:$0x3]
    %v739 = vld [vmem:[#allocation10] sm:$0xff]
    %v740 = vld [vmem:[#allocation10 + $0x8] sm:$0xff]
    %v741 = vld [vmem:[#allocation10 + $0x10] sm:$0xff]
    %v742 = vld [vmem:[#allocation10 + $0x18] sm:$0xff]
    %743 = vrot.lane.b32.xlu0 %v698, 32
    %v744 = vpop.permute.xlu0 %743
    %v745 = vsel %vm178, %v744, 0
    %747 = vmatprep.subr.mxu0 0.0
    %748 = vmatpush1.msra.mxu0 %v739
    %749 = vmatprep.subr.mxu0 0.0
    %750 = vmatpush1.msra.mxu0 %v740
    %751 = vmatprep.subr.mxu0 0.0
    %752 = vmatpush1.msra.mxu0 %v741
    %753 = vmatprep.subr.mxu0 0.0
    %754 = vmatpush1.msra.mxu0 %v742
    %755 = vmatprep.subr.mxu0 0.0
    %756 = vmatpush1.msra.mxu0 0.0
    %757 = vmatprep.subr.mxu0 0.0
    %758 = vmatpush1.msra.mxu0 0.0
    %759 = vmatprep.subr.mxu0 0.0
    %760 = vmatpush1.msra.mxu0 0.0
    %761 = vmatprep.subr.mxu0 0.0
    %762 = vmatpush1.msra.mxu0 0.0
    %763 = vmatprep.subr.mxu0 0.0
    %764 = vmatpush1.msra.mxu0 0.0
    %765 = vmatprep.subr.mxu0 0.0
    %766 = vmatpush1.msra.mxu0 0.0
    %767 = vmatprep.subr.mxu0 0.0
    %768 = vmatpush1.msra.mxu0 0.0
    %769 = vmatprep.subr.mxu0 0.0
    %770 = vmatpush1.msra.mxu0 0.0
    %771 = vmatprep.subr.mxu0 0.0
    %772 = vmatpush1.msra.mxu0 0.0
    %773 = vmatprep.subr.mxu0 0.0
    %774 = vmatpush1.msra.mxu0 0.0
    %775 = vmatprep.subr.mxu0 0.0
    %776 = vmatpush1.msra.mxu0 0.0
    %777 = vmatprep.subr.mxu0 0.0
    %778 = vmatpush1.msra.mxu0 0.0
    %779 = vmatprep.subr.mxu0 0.0
    %780 = vmatpush1.msra.mxu0 0.0
    %781 = vmatprep.subr.mxu0 0.0
    %782 = vmatpush1.msra.mxu0 0.0
    %783 = vmatprep.subr.mxu0 0.0
    %784 = vmatpush1.msra.mxu0 0.0
    %785 = vmatprep.subr.mxu0 0.0
    %786 = vmatpush1.msra.mxu0 0.0
    %787 = vmatprep.subr.mxu0 0.0
    %788 = vmatpush1.msra.mxu0 0.0
    %789 = vmatprep.subr.mxu0 0.0
    %790 = vmatpush1.msra.mxu0 0.0
    %791 = vmatprep.subr.mxu0 0.0
    %792 = vmatpush1.msra.mxu0 0.0
    %793 = vmatprep.subr.mxu0 0.0
    %794 = vmatpush1.msra.mxu0 0.0
    %795 = vmatprep.subr.mxu0 0.0
    %796 = vmatpush1.msra.mxu0 0.0
    %797 = vmatprep.subr.mxu0 0.0
    %798 = vmatpush1.msra.mxu0 0.0
    %799 = vmatprep.subr.mxu0 0.0
    %800 = vmatpush1.msra.mxu0 0.0
    %801 = vmatprep.subr.mxu0 0.0
    %802 = vmatpush1.msra.mxu0 0.0
    %803 = vmatprep.subr.mxu0 0.0
    %804 = vmatpush1.msra.mxu0 0.0
    %805 = vmatprep.subr.mxu0 0.0
    %806 = vmatpush1.msra.mxu0 0.0
    %807 = vmatprep.subr.mxu0 0.0
    %808 = vmatpush1.msra.mxu0 0.0
    %809 = vmatprep.subr.mxu0 0.0
    %810 = vmatpush1.msra.mxu0 0.0
    %811 = vmatprep.mubr.f32.mxu0 0.0
    %812 = vmatmul.mubr.f32.gmra.mrb[0].mxu0 %v745
    %v813 = vpop.f32.mrb[0].mxu0
    %v814 = vadd.f32 0.0, %v813
    %v815 = vpop.f32.mrb[0].mxu0
    %816 = vdwg.mxu0
    %v817 = vadd.f32 %v738, %v814
    %v818 = vmul.f32 %v817, %v170
    %v819 = vtanh.pop %v818
    %v820 = vmul.f32 %v819, 0.5
    %v821 = vadd.f32 %v820, 0.5
    %v822 = vmul.f32 %v821, %v692
    %824 = vrot.lane.b32.xlu0 %v819, 64
    %v825 = vpop.permute.xlu0 %824
    %v827 = vmul.f32 %v821, %v825
    %829 = vrot.lane.b32.xlu0 %v827, 32
    %v830 = vpop.permute.xlu0 %829
    %v832 = vadd.f32 %v822, %v830
    %v833 = vtanh.pop %v832
    %835 = vrot.lane.b32.xlu0 %v833, 64
    %v836 = vpop.permute.xlu0 %835
    %v838 = vmul.f32 %v821, %v836
    %v841 = vunpack.c.l.s4 1966171168
    %v842 = vunpack.c.0.s8 %v841
    %v843 = vlaneseq
    %v844 = vshrl.u32 %v843, 7
    %v845 = vsub.s32 %v842, %v844
    %v846 = vrot.slane %v838, %v845
    %v847 = vcombine.high %v846, %v846
    %v849 = vunpack.c.l.s4 1966171168
    %v850 = vunpack.c.0.s8 %v849
    %v851 = vlaneseq
    %v852 = vshrl.u32 %v851, 7
    %v853 = vsub.s32 %v850, %v852
    %v854 = vrot.slane %v846, %v853
    %v856 = vunpack.c.l.s4 1966171168
    %v857 = vunpack.c.0.s8 %v856
    %v858 = vlaneseq
    %v859 = vshrl.u32 %v858, 7
    %v860 = vsub.s32 %v857, %v859
    %v861 = vrot.slane %v847, %v860
    %v862 = vlaneseq
    %v863 = vshrl.u32 %v862, 7
    %v864 = vsub.s32 0, %v863
    %v865 = vrot.slane %v854, %v864
    %v866 = vlaneseq
    %v867 = vshrl.u32 %v866, 7
    %v868 = vsub.s32 0, %v867
    %v869 = vrot.slane %v861, %v868
    %870 = vrot.lane.b32.xlu0 %v865, 32
    %v871 = vpop.permute.xlu0 %870
    %872 = vrot.lane.b32.xlu0 %v869, 32
    %v873 = vpop.permute.xlu0 %872
    %876 = vst.msk [vmem:[#allocation11 + $0x4] sm:$0x1] %vm315, %v871
    %877 = vst.msk [vmem:[#allocation11 + $0xc] sm:$0x1] %vm315, %v873
    %v878 = vld [vmem:[#allocation2 + $0xa] sm:$0x3]
    %v879 = vld [vmem:[#allocation10] sm:$0xff]
    %v880 = vld [vmem:[#allocation10 + $0x8] sm:$0xff]
    %v881 = vld [vmem:[#allocation10 + $0x10] sm:$0xff]
    %v882 = vld [vmem:[#allocation10 + $0x18] sm:$0xff]
    %883 = vrot.lane.b32.xlu0 %v838, 32
    %v884 = vpop.permute.xlu0 %883
    %v885 = vsel %vm178, %v884, 0
    %887 = vmatprep.subr.mxu0 0.0
    %888 = vmatpush1.msra.mxu0 %v879
    %889 = vmatprep.subr.mxu0 0.0
    %890 = vmatpush1.msra.mxu0 %v880
    %891 = vmatprep.subr.mxu0 0.0
    %892 = vmatpush1.msra.mxu0 %v881
    %893 = vmatprep.subr.mxu0 0.0
    %894 = vmatpush1.msra.mxu0 %v882
    %895 = vmatprep.subr.mxu0 0.0
    %896 = vmatpush1.msra.mxu0 0.0
    %897 = vmatprep.subr.mxu0 0.0
    %898 = vmatpush1.msra.mxu0 0.0
    %899 = vmatprep.subr.mxu0 0.0
    %900 = vmatpush1.msra.mxu0 0.0
    %901 = vmatprep.subr.mxu0 0.0
    %902 = vmatpush1.msra.mxu0 0.0
    %903 = vmatprep.subr.mxu0 0.0
    %904 = vmatpush1.msra.mxu0 0.0
    %905 = vmatprep.subr.mxu0 0.0
    %906 = vmatpush1.msra.mxu0 0.0
    %907 = vmatprep.subr.mxu0 0.0
    %908 = vmatpush1.msra.mxu0 0.0
    %909 = vmatprep.subr.mxu0 0.0
    %910 = vmatpush1.msra.mxu0 0.0
    %911 = vmatprep.subr.mxu0 0.0
    %912 = vmatpush1.msra.mxu0 0.0
    %913 = vmatprep.subr.mxu0 0.0
    %914 = vmatpush1.msra.mxu0 0.0
    %915 = vmatprep.subr.mxu0 0.0
    %916 = vmatpush1.msra.mxu0 0.0
    %917 = vmatprep.subr.mxu0 0.0
    %918 = vmatpush1.msra.mxu0 0.0
    %919 = vmatprep.subr.mxu0 0.0
    %920 = vmatpush1.msra.mxu0 0.0
    %921 = vmatprep.subr.mxu0 0.0
    %922 = vmatpush1.msra.mxu0 0.0
    %923 = vmatprep.subr.mxu0 0.0
    %924 = vmatpush1.msra.mxu0 0.0
    %925 = vmatprep.subr.mxu0 0.0
    %926 = vmatpush1.msra.mxu0 0.0
    %927 = vmatprep.subr.mxu0 0.0
    %928 = vmatpush1.msra.mxu0 0.0
    %929 = vmatprep.subr.mxu0 0.0
    %930 = vmatpush1.msra.mxu0 0.0
    %931 = vmatprep.subr.mxu0 0.0
    %932 = vmatpush1.msra.mxu0 0.0
    %933 = vmatprep.subr.mxu0 0.0
    %934 = vmatpush1.msra.mxu0 0.0
    %935 = vmatprep.subr.mxu0 0.0
    %936 = vmatpush1.msra.mxu0 0.0
    %937 = vmatprep.subr.mxu0 0.0
    %938 = vmatpush1.msra.mxu0 0.0
    %939 = vmatprep.subr.mxu0 0.0
    %940 = vmatpush1.msra.mxu0 0.0
    %941 = vmatprep.subr.mxu0 0.0
    %942 = vmatpush1.msra.mxu0 0.0
    %943 = vmatprep.subr.mxu0 0.0
    %944 = vmatpush1.msra.mxu0 0.0
    %945 = vmatprep.subr.mxu0 0.0
    %946 = vmatpush1.msra.mxu0 0.0
    %947 = vmatprep.subr.mxu0 0.0
    %948 = vmatpush1.msra.mxu0 0.0
    %949 = vmatprep.subr.mxu0 0.0
    %950 = vmatpush1.msra.mxu0 0.0
    %951 = vmatprep.mubr.f32.mxu0 0.0
    %952 = vmatmul.mubr.f32.gmra.mrb[0].mxu0 %v885
    %v953 = vpop.f32.mrb[0].mxu0
    %v954 = vadd.f32 0.0, %v953
    %v955 = vpop.f32.mrb[0].mxu0
    %956 = vdwg.mxu0
    %v957 = vadd.f32 %v878, %v954
    %v958 = vmul.f32 %v957, %v170
    %v959 = vtanh.pop %v958
    %v960 = vmul.f32 %v959, 0.5
    %v961 = vadd.f32 %v960, 0.5
    %v962 = vmul.f32 %v961, %v832
    %964 = vrot.lane.b32.xlu0 %v959, 64
    %v965 = vpop.permute.xlu0 %964
    %v967 = vmul.f32 %v961, %v965
    %969 = vrot.lane.b32.xlu0 %v967, 32
    %v970 = vpop.permute.xlu0 %969
    %v972 = vadd.f32 %v962, %v970
    %v973 = vtanh.pop %v972
    %975 = vrot.lane.b32.xlu0 %v973, 64
    %v976 = vpop.permute.xlu0 %975
    %v978 = vmul.f32 %v961, %v976
    %v981 = vunpack.c.l.s4 1966171168
    %v982 = vunpack.c.0.s8 %v981
    %v983 = vlaneseq
    %v984 = vshrl.u32 %v983, 7
    %v985 = vsub.s32 %v982, %v984
    %v986 = vrot.slane %v978, %v985
    %v987 = vcombine.high %v986, %v986
    %v989 = vunpack.c.l.s4 1966171168
    %v990 = vunpack.c.0.s8 %v989
    %v991 = vlaneseq
    %v992 = vshrl.u32 %v991, 7
    %v993 = vsub.s32 %v990, %v992
    %v994 = vrot.slane %v986, %v993
    %v996 = vunpack.c.l.s4 1966171168
    %v997 = vunpack.c.0.s8 %v996
    %v998 = vlaneseq
    %v999 = vshrl.u32 %v998, 7
    %v1000 = vsub.s32 %v997, %v999
    %v1001 = vrot.slane %v987, %v1000
    %v1002 = vlaneseq
    %v1003 = vshrl.u32 %v1002, 7
    %v1004 = vsub.s32 0, %v1003
    %v1005 = vrot.slane %v994, %v1004
    %v1006 = vlaneseq
    %v1007 = vshrl.u32 %v1006, 7
    %v1008 = vsub.s32 0, %v1007
    %v1009 = vrot.slane %v1001, %v1008
    %1010 = vrot.lane.b32.xlu0 %v1005, 32
    %v1011 = vpop.permute.xlu0 %1010
    %1012 = vrot.lane.b32.xlu0 %v1009, 32
    %v1013 = vpop.permute.xlu0 %1012
    %1016 = vst.msk [vmem:[#allocation11 + $0x5] sm:$0x1] %vm315, %v1011
    %1017 = vst.msk [vmem:[#allocation11 + $0xd] sm:$0x1] %vm315, %v1013
    %v1018 = vld [vmem:[#allocation2 + $0xc] sm:$0x3]
    %v1019 = vld [vmem:[#allocation10] sm:$0xff]
    %v1020 = vld [vmem:[#allocation10 + $0x8] sm:$0xff]
    %v1021 = vld [vmem:[#allocation10 + $0x10] sm:$0xff]
    %v1022 = vld [vmem:[#allocation10 + $0x18] sm:$0xff]
    %1023 = vrot.lane.b32.xlu0 %v978, 32
    %v1024 = vpop.permute.xlu0 %1023
    %v1025 = vsel %vm178, %v1024, 0
    %1027 = vmatprep.subr.mxu0 0.0
    %1028 = vmatpush1.msra.mxu0 %v1019
    %1029 = vmatprep.subr.mxu0 0.0
    %1030 = vmatpush1.msra.mxu0 %v1020
    %1031 = vmatprep.subr.mxu0 0.0
    %1032 = vmatpush1.msra.mxu0 %v1021
    %1033 = vmatprep.subr.mxu0 0.0
    %1034 = vmatpush1.msra.mxu0 %v1022
    %1035 = vmatprep.subr.mxu0 0.0
    %1036 = vmatpush1.msra.mxu0 0.0
    %1037 = vmatprep.subr.mxu0 0.0
    %1038 = vmatpush1.msra.mxu0 0.0
    %1039 = vmatprep.subr.mxu0 0.0
    %1040 = vmatpush1.msra.mxu0 0.0
    %1041 = vmatprep.subr.mxu0 0.0
    %1042 = vmatpush1.msra.mxu0 0.0
    %1043 = vmatprep.subr.mxu0 0.0
    %1044 = vmatpush1.msra.mxu0 0.0
    %1045 = vmatprep.subr.mxu0 0.0
    %1046 = vmatpush1.msra.mxu0 0.0
    %1047 = vmatprep.subr.mxu0 0.0
    %1048 = vmatpush1.msra.mxu0 0.0
    %1049 = vmatprep.subr.mxu0 0.0
    %1050 = vmatpush1.msra.mxu0 0.0
    %1051 = vmatprep.subr.mxu0 0.0
    %1052 = vmatpush1.msra.mxu0 0.0
    %1053 = vmatprep.subr.mxu0 0.0
    %1054 = vmatpush1.msra.mxu0 0.0
    %1055 = vmatprep.subr.mxu0 0.0
    %1056 = vmatpush1.msra.mxu0 0.0
    %1057 = vmatprep.subr.mxu0 0.0
    %1058 = vmatpush1.msra.mxu0 0.0
    %1059 = vmatprep.subr.mxu0 0.0
    %1060 = vmatpush1.msra.mxu0 0.0
    %1061 = vmatprep.subr.mxu0 0.0
    %1062 = vmatpush1.msra.mxu0 0.0
    %1063 = vmatprep.subr.mxu0 0.0
    %1064 = vmatpush1.msra.mxu0 0.0
    %1065 = vmatprep.subr.mxu0 0.0
    %1066 = vmatpush1.msra.mxu0 0.0
    %1067 = vmatprep.subr.mxu0 0.0
    %1068 = vmatpush1.msra.mxu0 0.0
    %1069 = vmatprep.subr.mxu0 0.0
    %1070 = vmatpush1.msra.mxu0 0.0
    %1071 = vmatprep.subr.mxu0 0.0
    %1072 = vmatpush1.msra.mxu0 0.0
    %1073 = vmatprep.subr.mxu0 0.0
    %1074 = vmatpush1.msra.mxu0 0.0
    %1075 = vmatprep.subr.mxu0 0.0
    %1076 = vmatpush1.msra.mxu0 0.0
    %1077 = vmatprep.subr.mxu0 0.0
    %1078 = vmatpush1.msra.mxu0 0.0
    %1079 = vmatprep.subr.mxu0 0.0
    %1080 = vmatpush1.msra.mxu0 0.0
    %1081 = vmatprep.subr.mxu0 0.0
    %1082 = vmatpush1.msra.mxu0 0.0
    %1083 = vmatprep.subr.mxu0 0.0
    %1084 = vmatpush1.msra.mxu0 0.0
    %1085 = vmatprep.subr.mxu0 0.0
    %1086 = vmatpush1.msra.mxu0 0.0
    %1087 = vmatprep.subr.mxu0 0.0
    %1088 = vmatpush1.msra.mxu0 0.0
    %1089 = vmatprep.subr.mxu0 0.0
    %1090 = vmatpush1.msra.mxu0 0.0
    %1091 = vmatprep.mubr.f32.mxu0 0.0
    %1092 = vmatmul.mubr.f32.gmra.mrb[0].mxu0 %v1025
    %v1093 = vpop.f32.mrb[0].mxu0
    %v1094 = vadd.f32 0.0, %v1093
    %v1095 = vpop.f32.mrb[0].mxu0
    %1096 = vdwg.mxu0
    %v1097 = vadd.f32 %v1018, %v1094
    %v1098 = vmul.f32 %v1097, %v170
    %v1099 = vtanh.pop %v1098
    %v1100 = vmul.f32 %v1099, 0.5
    %v1101 = vadd.f32 %v1100, 0.5
    %v1102 = vmul.f32 %v1101, %v972
    %1104 = vrot.lane.b32.xlu0 %v1099, 64
    %v1105 = vpop.permute.xlu0 %1104
    %v1107 = vmul.f32 %v1101, %v1105
    %1109 = vrot.lane.b32.xlu0 %v1107, 32
    %v1110 = vpop.permute.xlu0 %1109
    %v1112 = vadd.f32 %v1102, %v1110
    %v1113 = vtanh.pop %v1112
    %1115 = vrot.lane.b32.xlu0 %v1113, 64
    %v1116 = vpop.permute.xlu0 %1115
    %v1118 = vmul.f32 %v1101, %v1116
    %v1121 = vunpack.c.l.s4 1966171168
    %v1122 = vunpack.c.0.s8 %v1121
    %v1123 = vlaneseq
    %v1124 = vshrl.u32 %v1123, 7
    %v1125 = vsub.s32 %v1122, %v1124
    %v1126 = vrot.slane %v1118, %v1125
    %v1127 = vcombine.high %v1126, %v1126
    %v1129 = vunpack.c.l.s4 1966171168
    %v1130 = vunpack.c.0.s8 %v1129
    %v1131 = vlaneseq
    %v1132 = vshrl.u32 %v1131, 7
    %v1133 = vsub.s32 %v1130, %v1132
    %v1134 = vrot.slane %v1126, %v1133
    %v1136 = vunpack.c.l.s4 1966171168
    %v1137 = vunpack.c.0.s8 %v1136
    %v1138 = vlaneseq
    %v1139 = vshrl.u32 %v1138, 7
    %v1140 = vsub.s32 %v1137, %v1139
    %v1141 = vrot.slane %v1127, %v1140
    %v1142 = vlaneseq
    %v1143 = vshrl.u32 %v1142, 7
    %v1144 = vsub.s32 0, %v1143
    %v1145 = vrot.slane %v1134, %v1144
    %v1146 = vlaneseq
    %v1147 = vshrl.u32 %v1146, 7
    %v1148 = vsub.s32 0, %v1147
    %v1149 = vrot.slane %v1141, %v1148
    %1150 = vrot.lane.b32.xlu0 %v1145, 32
    %v1151 = vpop.permute.xlu0 %1150
    %1152 = vrot.lane.b32.xlu0 %v1149, 32
    %v1153 = vpop.permute.xlu0 %1152
    %1156 = vst.msk [vmem:[#allocation11 + $0x6] sm:$0x1] %vm315, %v1151
    %1157 = vst.msk [vmem:[#allocation11 + $0xe] sm:$0x1] %vm315, %v1153
    %v1158 = vld [vmem:[#allocation2 + $0xe] sm:$0x3]
    %v1159 = vld [vmem:[#allocation10] sm:$0xff]
    %v1160 = vld [vmem:[#allocation10 + $0x8] sm:$0xff]
    %v1161 = vld [vmem:[#allocation10 + $0x10] sm:$0xff]
    %v1162 = vld [vmem:[#allocation10 + $0x18] sm:$0xff]
    %1163 = vrot.lane.b32.xlu0 %v1118, 32
    %v1164 = vpop.permute.xlu0 %1163
    %v1165 = vsel %vm178, %v1164, 0
    %1167 = vmatprep.subr.mxu0 0.0
    %1168 = vmatpush1.msra.mxu0 %v1159
    %1169 = vmatprep.subr.mxu0 0.0
    %1170 = vmatpush1.msra.mxu0 %v1160
    %1171 = vmatprep.subr.mxu0 0.0
    %1172 = vmatpush1.msra.mxu0 %v1161
    %1173 = vmatprep.subr.mxu0 0.0
    %1174 = vmatpush1.msra.mxu0 %v1162
    %1175 = vmatprep.subr.mxu0 0.0
    %1176 = vmatpush1.msra.mxu0 0.0
    %1177 = vmatprep.subr.mxu0 0.0
    %1178 = vmatpush1.msra.mxu0 0.0
    %1179 = vmatprep.subr.mxu0 0.0
    %1180 = vmatpush1.msra.mxu0 0.0
    %1181 = vmatprep.subr.mxu0 0.0
    %1182 = vmatpush1.msra.mxu0 0.0
    %1183 = vmatprep.subr.mxu0 0.0
    %1184 = vmatpush1.msra.mxu0 0.0
    %1185 = vmatprep.subr.mxu0 0.0
    %1186 = vmatpush1.msra.mxu0 0.0
    %1187 = vmatprep.subr.mxu0 0.0
    %1188 = vmatpush1.msra.mxu0 0.0
    %1189 = vmatprep.subr.mxu0 0.0
    %1190 = vmatpush1.msra.mxu0 0.0
    %1191 = vmatprep.subr.mxu0 0.0
    %1192 = vmatpush1.msra.mxu0 0.0
    %1193 = vmatprep.subr.mxu0 0.0
    %1194 = vmatpush1.msra.mxu0 0.0
    %1195 = vmatprep.subr.mxu0 0.0
    %1196 = vmatpush1.msra.mxu0 0.0
    %1197 = vmatprep.subr.mxu0 0.0
    %1198 = vmatpush1.msra.mxu0 0.0
    %1199 = vmatprep.subr.mxu0 0.0
    %1200 = vmatpush1.msra.mxu0 0.0
    %1201 = vmatprep.subr.mxu0 0.0
    %1202 = vmatpush1.msra.mxu0 0.0
    %1203 = vmatprep.subr.mxu0 0.0
    %1204 = vmatpush1.msra.mxu0 0.0
    %1205 = vmatprep.subr.mxu0 0.0
    %1206 = vmatpush1.msra.mxu0 0.0
    %1207 = vmatprep.subr.mxu0 0.0
    %1208 = vmatpush1.msra.mxu0 0.0
    %1209 = vmatprep.subr.mxu0 0.0
    %1210 = vmatpush1.msra.mxu0 0.0
    %1211 = vmatprep.subr.mxu0 0.0
    %1212 = vmatpush1.msra.mxu0 0.0
    %1213 = vmatprep.subr.mxu0 0.0
    %1214 = vmatpush1.msra.mxu0 0.0
    %1215 = vmatprep.subr.mxu0 0.0
    %1216 = vmatpush1.msra.mxu0 0.0
    %1217 = vmatprep.subr.mxu0 0.0
    %1218 = vmatpush1.msra.mxu0 0.0
    %1219 = vmatprep.subr.mxu0 0.0
    %1220 = vmatpush1.msra.mxu0 0.0
    %1221 = vmatprep.subr.mxu0 0.0
    %1222 = vmatpush1.msra.mxu0 0.0
    %1223 = vmatprep.subr.mxu0 0.0
    %1224 = vmatpush1.msra.mxu0 0.0
    %1225 = vmatprep.subr.mxu0 0.0
    %1226 = vmatpush1.msra.mxu0 0.0
    %1227 = vmatprep.subr.mxu0 0.0
    %1228 = vmatpush1.msra.mxu0 0.0
    %1229 = vmatprep.subr.mxu0 0.0
    %1230 = vmatpush1.msra.mxu0 0.0
    %1231 = vmatprep.mubr.f32.mxu0 0.0
    %1232 = vmatmul.mubr.f32.gmra.mrb[0].mxu0 %v1165
    %v1233 = vpop.f32.mrb[0].mxu0
    %v1234 = vadd.f32 0.0, %v1233
    %v1235 = vpop.f32.mrb[0].mxu0
    %1236 = vdwg.mxu0
    %v1237 = vadd.f32 %v1158, %v1234
    %v1238 = vmul.f32 %v1237, %v170
    %v1239 = vtanh.pop %v1238
    %v1240 = vmul.f32 %v1239, 0.5
    %v1241 = vadd.f32 %v1240, 0.5
    %v1242 = vmul.f32 %v1241, %v1112
    %1244 = vrot.lane.b32.xlu0 %v1239, 64
    %v1245 = vpop.permute.xlu0 %1244
    %v1247 = vmul.f32 %v1241, %v1245
    %1249 = vrot.lane.b32.xlu0 %v1247, 32
    %v1250 = vpop.permute.xlu0 %1249
    %v1252 = vadd.f32 %v1242, %v1250
    %v1253 = vtanh.pop %v1252
    %1255 = vrot.lane.b32.xlu0 %v1253, 64
    %v1256 = vpop.permute.xlu0 %1255
    %v1258 = vmul.f32 %v1241, %v1256
    %v1261 = vunpack.c.l.s4 1966171168
    %v1262 = vunpack.c.0.s8 %v1261
    %v1263 = vlaneseq
    %v1264 = vshrl.u32 %v1263, 7
    %v1265 = vsub.s32 %v1262, %v1264
    %v1266 = vrot.slane %v1258, %v1265
    %v1267 = vcombine.high %v1266, %v1266
    %v1269 = vunpack.c.l.s4 1966171168
    %v1270 = vunpack.c.0.s8 %v1269
    %v1271 = vlaneseq
    %v1272 = vshrl.u32 %v1271, 7
    %v1273 = vsub.s32 %v1270, %v1272
    %v1274 = vrot.slane %v1266, %v1273
    %v1276 = vunpack.c.l.s4 1966171168
    %v1277 = vunpack.c.0.s8 %v1276
    %v1278 = vlaneseq
    %v1279 = vshrl.u32 %v1278, 7
    %v1280 = vsub.s32 %v1277, %v1279
    %v1281 = vrot.slane %v1267, %v1280
    %v1282 = vlaneseq
    %v1283 = vshrl.u32 %v1282, 7
    %v1284 = vsub.s32 0, %v1283
    %v1285 = vrot.slane %v1274, %v1284
    %v1286 = vlaneseq
    %v1287 = vshrl.u32 %v1286, 7
    %v1288 = vsub.s32 0, %v1287
    %v1289 = vrot.slane %v1281, %v1288
    %1290 = vrot.lane.b32.xlu0 %v1285, 32
    %v1291 = vpop.permute.xlu0 %1290
    %1292 = vrot.lane.b32.xlu0 %v1289, 32
    %v1293 = vpop.permute.xlu0 %1292
    %1296 = vst.msk [vmem:[#allocation11 + $0x7] sm:$0x1] %vm315, %v1291
    %1297 = vst.msk [vmem:[#allocation11 + $0xf] sm:$0x1] %vm315, %v1293
    %1298 = vrot.lane.b32.xlu0 %v1258, 32
    %v1299 = vpop.permute.xlu0 %1298
    %vm1301 = vcmask 254976
    %1302 = vst.msk [vmem:[#allocation3] sm:$0x3] %vm1301, %v1299
    %1304 = vrot.lane.b32.xlu0 %v1252, 96
    %v1305 = vpop.permute.xlu0 %1304
    %1307 = vst.msk [vmem:[#allocation4] sm:$0x3] %vm1301, %v1305
    %1308 = vst.msk [vmem:[#allocation12] sm:$0x3] %vm1301, %v1299
    %1309 = vst.msk [vmem:[#allocation14] sm:$0x3] %vm1301, %v1305
    // Predicated region
    $region34: #{tpu_custom_call.1} parent=1 // pred_check
      _
    $region35: #{tpu_custom_call.1} parent=1 // pred_check_branch
      %1311 = sbr.rel (0) target = $region37
    $region36: #{tpu_custom_call.1} parent=1 // pred_region
      %s1313 = ssub.s32 256, 256
      %1314 = vsyncadd [#allocation7], %s1313
      %s1315 = sshll.u32 [#allocation11], 4
      %s1316 = int_to_ptr.vmem [resolvable:$true] %s1315
      %1321 = dma.vmem_to_hbm [thread:$0]  %s1316, 256, %s4, [#allocation7], 128, 128, 8
    $region37: #{tpu_custom_call.1} parent=1 // pred_fallthru
      _
    // Predicated region
    $region38: #{tpu_custom_call.1} parent=1 // pred_check
      _
    $region39: #{tpu_custom_call.1} parent=1 // pred_check_branch
      %1323 = sbr.rel (0) target = $region41
    $region40: #{tpu_custom_call.1} parent=1 // pred_region
      %s1325 = ssub.s32 32, 32
      %1326 = vsyncadd [#allocation13], %s1325
      %s1328 = sshll.u32 [#allocation12], 4
      %s1329 = int_to_ptr.vmem [resolvable:$true] %s1328
      %1331 = dma.vmem_to_hbm [thread:$0]  %s1329, 32, %s5, [#allocation13]
    $region41: #{tpu_custom_call.1} parent=1 // pred_fallthru
      _
    // Predicated region
    $region42: #{tpu_custom_call.1} parent=1 // pred_check
      _
    $region43: #{tpu_custom_call.1} parent=1 // pred_check_branch
      %1333 = sbr.rel (0) target = $region45
    $region44: #{tpu_custom_call.1} parent=1 // pred_region
      %s1335 = ssub.s32 32, 32
      %1336 = vsyncadd [#allocation13], %s1335
      %s1338 = sshll.u32 [#allocation14], 4
      %s1339 = int_to_ptr.vmem [resolvable:$true] %s1338
      %1341 = dma.vmem_to_hbm [thread:$0]  %s1339, 32, %s6, [#allocation13]
    $region45: #{tpu_custom_call.1} parent=1 // pred_fallthru
      _
    // Predicated region
    $region46: #{tpu_custom_call.1} parent=1 // pred_check
      _
    $region47: #{tpu_custom_call.1} parent=1 // pred_check_branch
      %1343 = sbr.rel (0) target = $region49
    $region48: #{tpu_custom_call.1} parent=1 // pred_region
      %1344 = dma.done [#allocation7], 256
    $region49: #{tpu_custom_call.1} parent=1 // pred_fallthru
      _
    // Predicated region
    $region50: #{tpu_custom_call.1} parent=1 // pred_check
      _
    $region51: #{tpu_custom_call.1} parent=1 // pred_check_branch
      %1346 = sbr.rel (0) target = $region53
    $region52: #{tpu_custom_call.1} parent=1 // pred_region
      %1347 = dma.done [#allocation13], 32
    $region53: #{tpu_custom_call.1} parent=1 // pred_fallthru
      _
    // Predicated region
    $region54: #{tpu_custom_call.1} parent=1 // pred_check
      _
    $region55: #{tpu_custom_call.1} parent=1 // pred_check_branch
      %1349 = sbr.rel (0) target = $region57
    $region56: #{tpu_custom_call.1} parent=1 // pred_region
      %1350 = dma.done [#allocation13], 32
    $region57: #{tpu_custom_call.1} parent=1 // pred_fallthru
      _
    %1351 = vsyncpa [#allocation6], 1
    %1352 = vsyncpa [#allocation9], 1
    %1353 = vsyncpa [#allocation7], 1
    %1354 = vsyncpa [#allocation13], 1

</llo_original>
